<compile_context>
chip_gen: v7x
topology: tpu7x:2x2x1
jax: 0.10.0
libtpu: 0.0.40
codegen_flags: <defaults>
</compile_context>

<pallas_src>
import functools

import jax
import jax.numpy as jnp
from jax.experimental import pallas as pl
from jax.experimental.pallas import tpu as pltpu


def _transformer_kernel(x_ref, wqkv_ref, bqkv_ref, wo3_ref, w1_ref, b1_ref,
                        w2_ref, vecd_ref, out_ref, *, batch, seq, heads, head_dim):
    D = heads * head_dim
    x = x_ref[...]                                    # (B*S, D) f32
    x_bf = x.astype(jnp.bfloat16)

    # Hoisted (packed) parameter loads.
    bqkv = bqkv_ref[...]                              # (1, 3D) f32
    b1 = b1_ref[...]                                  # (1, 4D) f32
    vecd = vecd_ref[...]                              # (6, D)  f32  packed small params
    bo, g1, be1 = vecd[0:1], vecd[1:2], vecd[2:3]
    b2, g2, be2 = vecd[3:4], vecd[4:5], vecd[5:6]
    wo3 = wo3_ref[...]                                # (H, hd, D) bf16

    def layernorm(v, g, b, eps=1e-5):
        mu = jnp.mean(v, axis=-1, keepdims=True)
        var = jnp.mean((v - mu) ** 2, axis=-1, keepdims=True)
        return (v - mu) * jax.lax.rsqrt(var + eps) * g + b

    # ---- Fused QKV projection on the flattened token matrix (1 MXU push) ------------
    qkv = jnp.dot(x_bf, wqkv_ref[...],
                  preferred_element_type=jnp.float32) + bqkv        # (B*S, 3D) f32

    # ---- Attention: per batch (static unroll), heads as the leading batch dim -------
    attn_rows = []
    for b in range(batch):
        rows = slice(b * seq, (b + 1) * seq)

        def split(t):  # (S, D) f32 -> (H, S, hd) bf16
            return jnp.transpose(t.reshape(seq, heads, head_dim),
                                 (1, 0, 2)).astype(jnp.bfloat16)

        q3 = split(qkv[rows, 0:D])         # 1/sqrt(hd) already folded into W_q / b_q
        k3 = split(qkv[rows, D:2 * D])
        v3 = split(qkv[rows, 2 * D:3 * D])

        s = jnp.einsum("hqd,hkd->hqk", q3, k3,
                       preferred_element_type=jnp.float32)          # (H, S, S) f32
        s = s - jnp.max(s, axis=-1, keepdims=True)
        p = jnp.exp(s)
        p = p * pl.reciprocal(jnp.sum(p, axis=-1, keepdims=True), approx=False)

        o3 = jnp.einsum("hqk,hkd->hqd", p.astype(jnp.bfloat16), v3,
                        preferred_element_type=jnp.float32)         # (H, S, hd) f32
        # fc_out fused with the head merge: sum_h O_h @ W_o[h] == concat_h(O_h) @ W_o
        ob = jnp.einsum("hqd,hdn->hqn", o3.astype(jnp.bfloat16), wo3,
                        preferred_element_type=jnp.float32)         # (H, S, D) f32
        attn_rows.append(jnp.sum(ob, axis=0))                       # (S, D)

    attn = jnp.concatenate(attn_rows, axis=0) + bo                  # (B*S, D)

    # ---- Residual + LayerNorm 1 ------------------------------------------------------
    y = layernorm(attn + x, g1, be1)

    # ---- Feed-forward (D -> 4D -> D) with ReLU, flattened tokens ----------------------
    h1 = jnp.maximum(
        jnp.dot(y.astype(jnp.bfloat16), w1_ref[...],
                preferred_element_type=jnp.float32) + b1, 0.0)
    y2 = jnp.dot(h1.astype(jnp.bfloat16), w2_ref[...],
                 preferred_element_type=jnp.float32) + b2

    # ---- Residual + LayerNorm 2 ------------------------------------------------------
    out_ref[...] = layernorm(y2 + y, g2, be2).astype(out_ref.dtype)


def _prepare_operands(params, heads):
    """Host-side (free) weight packing: fused QKV, folded scale, reshaped W_o, packed vecs."""
    D = params["wq"].shape[0]
    hd = D // heads
    scale = 1.0 / (hd ** 0.5)
    wqkv = jnp.concatenate([params["wq"] * scale, params["wk"], params["wv"]],
                           axis=1).astype(jnp.bfloat16)                    # (D, 3D)
    bqkv = jnp.concatenate([params["bq"] * scale, params["bk"], params["bv"]],
                           axis=1).astype(jnp.float32)                     # (1, 3D)
    wo3 = params["wo"].reshape(heads, hd, D).astype(jnp.bfloat16)          # (H, hd, D)
    w1 = params["w1"].astype(jnp.bfloat16)                                 # (D, 4D)
    b1 = params["b1"].astype(jnp.float32)                                  # (1, 4D)
    w2 = params["w2"].astype(jnp.bfloat16)                                 # (4D, D)
    vecd = jnp.concatenate([params["bo"], params["g1"], params["be1"],
                            params["b2"], params["g2"], params["be2"]],
                           axis=0).astype(jnp.float32)                     # (6, D)
    return wqkv, bqkv, wo3, w1, b1, w2, vecd


def simple_transformer_pallas(x, params, heads):
    B, S, D = x.shape
    head_dim = D // heads
    operands = _prepare_operands(params, heads)

    kernel = functools.partial(_transformer_kernel, batch=B, seq=S,
                               heads=heads, head_dim=head_dim)
    vmem = pl.BlockSpec(memory_space=pltpu.MemorySpace.VMEM)   # whole-array blocks in VMEM

    out_flat = pl.pallas_call(
        kernel,
        out_shape=jax.ShapeDtypeStruct((B * S, D), jnp.float32),
        in_specs=[vmem] * (1 + len(operands)),
        out_specs=vmem,
    )(x.reshape(B * S, D), *operands)
    return out_flat.reshape(B, S, D)


def simple_transformer_ref(x, params, heads):
    """Pure-JAX f32 reference matching the PyTorch forward exactly."""
    B, S, D = x.shape
    hd = D // heads

    def lin(v, w, b):
        return v @ w + b

    q = lin(x, params["wq"], params["bq"]).reshape(B, S, heads, hd).transpose(0, 2, 1, 3)
    k = lin(x, params["wk"], params["bk"]).reshape(B, S, heads, hd).transpose(0, 2, 1, 3)
    v = lin(x, params["wv"], params["bv"]).reshape(B, S, heads, hd).transpose(0, 2, 1, 3)
    scores = jnp.einsum("bhqd,bhkd->bhqk", q, k) / (hd ** 0.5)
    attn_w = jax.nn.softmax(scores, axis=-1)
    attn = jnp.einsum("bhqk,bhkd->bhqd", attn_w, v).transpose(0, 2, 1, 3).reshape(B, S, D)
    attn = lin(attn, params["wo"], params["bo"])

    def ln(v, g, b, eps=1e-5):
        mu = jnp.mean(v, axis=-1, keepdims=True)
        var = jnp.mean((v - mu) ** 2, axis=-1, keepdims=True)
        return (v - mu) / jnp.sqrt(var + eps) * g + b

    y = ln(attn + x, params["g1"], params["be1"])
    h1 = jax.nn.relu(lin(y, params["w1"], params["b1"]))
    y2 = lin(h1, params["w2"], params["b2"])
    return ln(y2 + y, params["g2"], params["be2"])


def init_params(key, d_model):
    """Deterministic synthetic parameters (shapes match SimpleTransformer.__init__)."""
    ks = jax.random.split(key, 8)
    scale = 0.05

    def w(k, shape):
        return (scale * jax.random.normal(k, shape)).astype(jnp.float32)

    D = d_model
    return {
        "wq": w(ks[0], (D, D)),      "bq": w(ks[1], (1, D)),
        "wk": w(ks[2], (D, D)),      "bk": w(ks[3], (1, D)),
        "wv": w(ks[4], (D, D)),      "bv": w(ks[5], (1, D)),
        "wo": w(ks[6], (D, D)),      "bo": w(ks[7], (1, D)),
        "w1": w(jax.random.fold_in(key, 100), (D, 4 * D)),
        "b1": w(jax.random.fold_in(key, 101), (1, 4 * D)),
        "w2": w(jax.random.fold_in(key, 102), (4 * D, D)),
        "b2": w(jax.random.fold_in(key, 103), (1, D)),
        "g1": jnp.ones((1, D), jnp.float32),  "be1": jnp.zeros((1, D), jnp.float32),
        "g2": jnp.ones((1, D), jnp.float32),  "be2": jnp.zeros((1, D), jnp.float32),
    }


if __name__ == "__main__":
    B, S, D, HEADS = 2, 8, 32, 4

    key = jax.random.PRNGKey(0)
    k_x, k_p = jax.random.split(key)
    x = jax.random.normal(k_x, (B, S, D), dtype=jnp.float32)
    params = init_params(k_p, D)

    out = jax.block_until_ready(simple_transformer_pallas(x, params, HEADS))
    ref = simple_transformer_ref(x, params, HEADS)

    assert out.shape == (B, S, D)
    # bf16 MXU operands (f32 accumulation) are a deliberate precision trade; softmax uses
    # the exact reciprocal, so the residual error comes from the bf16 weight/activation casts.
    assert jnp.allclose(out, ref, atol=2e-2, rtol=2e-2), "Pallas output mismatch vs reference"

    print("KERNEL_OK")
</pallas_src>

<mosaic_0001>
module attributes {stable_mosaic.version = 11 : i64} {
  func.func @_transformer_kernel(%arg0: memref<16x32xf32, #tpu.memory_space<vmem>>, %arg1: memref<32x96xbf16, #tpu.memory_space<vmem>>, %arg2: memref<1x96xf32, #tpu.memory_space<vmem>>, %arg3: memref<4x8x32xbf16, #tpu.memory_space<vmem>>, %arg4: memref<32x128xbf16, #tpu.memory_space<vmem>>, %arg5: memref<1x128xf32, #tpu.memory_space<vmem>>, %arg6: memref<128x32xbf16, #tpu.memory_space<vmem>>, %arg7: memref<6x32xf32, #tpu.memory_space<vmem>>, %arg8: memref<16x32xf32, #tpu.memory_space<vmem>>) attributes {dimension_semantics = [], scalar_prefetch = 0 : i64, scratch_operands = 0 : i64, tpu.core_type = #tpu.core_type<tc>} {
    %c0 = arith.constant 0 : index
    %c0_0 = arith.constant 0 : index
    %0 = vector.load %arg0[%c0, %c0_0] : memref<16x32xf32, #tpu.memory_space<vmem>>, vector<16x32xf32>
    %1 = arith.truncf %0 : vector<16x32xf32> to vector<16x32xbf16>
    %c0_1 = arith.constant 0 : index
    %c0_2 = arith.constant 0 : index
    %2 = vector.load %arg2[%c0_1, %c0_2] : memref<1x96xf32, #tpu.memory_space<vmem>>, vector<1x96xf32>
    %c0_3 = arith.constant 0 : index
    %c0_4 = arith.constant 0 : index
    %3 = vector.load %arg5[%c0_3, %c0_4] : memref<1x128xf32, #tpu.memory_space<vmem>>, vector<1x128xf32>
    %c0_5 = arith.constant 0 : index
    %c0_6 = arith.constant 0 : index
    %4 = vector.load %arg7[%c0_5, %c0_6] : memref<6x32xf32, #tpu.memory_space<vmem>>, vector<6x32xf32>
    %5 = vector.extract_strided_slice %4 {offsets = [0, 0], sizes = [1, 32], strides = [1, 1]} : vector<6x32xf32> to vector<1x32xf32>
    %6 = vector.extract_strided_slice %4 {offsets = [1, 0], sizes = [1, 32], strides = [1, 1]} : vector<6x32xf32> to vector<1x32xf32>
    %7 = vector.extract_strided_slice %4 {offsets = [2, 0], sizes = [1, 32], strides = [1, 1]} : vector<6x32xf32> to vector<1x32xf32>
    %8 = vector.extract_strided_slice %4 {offsets = [3, 0], sizes = [1, 32], strides = [1, 1]} : vector<6x32xf32> to vector<1x32xf32>
    %9 = vector.extract_strided_slice %4 {offsets = [4, 0], sizes = [1, 32], strides = [1, 1]} : vector<6x32xf32> to vector<1x32xf32>
    %10 = vector.extract_strided_slice %4 {offsets = [5, 0], sizes = [1, 32], strides = [1, 1]} : vector<6x32xf32> to vector<1x32xf32>
    %c0_7 = arith.constant 0 : index
    %c0_8 = arith.constant 0 : index
    %c0_9 = arith.constant 0 : index
    %11 = vector.load %arg3[%c0_7, %c0_8, %c0_9] : memref<4x8x32xbf16, #tpu.memory_space<vmem>>, vector<4x8x32xbf16>
    %c0_10 = arith.constant 0 : index
    %c0_11 = arith.constant 0 : index
    %12 = vector.load %arg1[%c0_10, %c0_11] : memref<32x96xbf16, #tpu.memory_space<vmem>>, vector<32x96xbf16>
    %cst = arith.constant dense<0.000000e+00> : vector<16x96xf32>
    %13 = tpu.matmul %1, %12, %cst {dimension_numbers = #tpu.dot_dimension_numbers<[1], [0], [0], [1], [0, 0, 1, 1], [], []>} : vector<16x32xbf16>, vector<32x96xbf16>, vector<16x96xf32> -> vector<16x96xf32>
    %14 = vector.broadcast %2 : vector<1x96xf32> to vector<16x96xf32>
    %15 = arith.addf %13, %14 : vector<16x96xf32>
    %16 = vector.extract_strided_slice %15 {offsets = [0, 0], sizes = [8, 32], strides = [1, 1]} : vector<16x96xf32> to vector<8x32xf32>
    %17 = vector.shape_cast %16 : vector<8x32xf32> to vector<8x4x8xf32>
    %18 = tpu.transpose %17, [1, 0, 2] : vector<8x4x8xf32> -> vector<4x8x8xf32>
    %19 = arith.truncf %18 : vector<4x8x8xf32> to vector<4x8x8xbf16>
    %20 = vector.extract_strided_slice %15 {offsets = [0, 32], sizes = [8, 32], strides = [1, 1]} : vector<16x96xf32> to vector<8x32xf32>
    %21 = vector.shape_cast %20 : vector<8x32xf32> to vector<8x4x8xf32>
    %22 = tpu.transpose %21, [1, 0, 2] : vector<8x4x8xf32> -> vector<4x8x8xf32>
    %23 = arith.truncf %22 : vector<4x8x8xf32> to vector<4x8x8xbf16>
    %24 = vector.extract_strided_slice %15 {offsets = [0, 64], sizes = [8, 32], strides = [1, 1]} : vector<16x96xf32> to vector<8x32xf32>
    %25 = vector.shape_cast %24 : vector<8x32xf32> to vector<8x4x8xf32>
    %26 = tpu.transpose %25, [1, 0, 2] : vector<8x4x8xf32> -> vector<4x8x8xf32>
    %27 = arith.truncf %26 : vector<4x8x8xf32> to vector<4x8x8xbf16>
    "tpu.trace_start"() <{level = 10 : i32, message = "hqd,hkd->hqk"}> : () -> ()
    %cst_12 = arith.constant dense<0.000000e+00> : vector<4x8x8xf32>
    %28 = tpu.matmul %19, %23, %cst_12 {dimension_numbers = #tpu.dot_dimension_numbers<[2], [2], [1], [1], [0, 0, 0, 1, 1, 1], [0], [0]>} : vector<4x8x8xbf16>, vector<4x8x8xbf16>, vector<4x8x8xf32> -> vector<4x8x8xf32>
    "tpu.trace_stop"() : () -> ()
    %cst_13 = arith.constant dense<0xFF800000> : vector<4x8xf32>
    %29 = vector.multi_reduction <maximumf>, %28, %cst_13 [2] : vector<4x8x8xf32> to vector<4x8xf32>
    %30 = vector.shape_cast %29 : vector<4x8xf32> to vector<4x8x1xf32>
    %31 = vector.broadcast %30 : vector<4x8x1xf32> to vector<4x8x8xf32>
    %32 = arith.subf %28, %31 : vector<4x8x8xf32>
    %33 = math.exp %32 : vector<4x8x8xf32>
    %cst_14 = arith.constant dense<0.000000e+00> : vector<4x8xf32>
    %34 = vector.multi_reduction <add>, %33, %cst_14 [2] : vector<4x8x8xf32> to vector<4x8xf32>
    %35 = vector.shape_cast %34 : vector<4x8xf32> to vector<4x8x1xf32>
    %36 = tpu.reciprocal %35 : vector<4x8x1xf32> -> vector<4x8x1xf32>
    %37 = vector.broadcast %36 : vector<4x8x1xf32> to vector<4x8x8xf32>
    %38 = arith.mulf %33, %37 : vector<4x8x8xf32>
    %39 = arith.truncf %38 : vector<4x8x8xf32> to vector<4x8x8xbf16>
    "tpu.trace_start"() <{level = 10 : i32, message = "hqk,hkd->hqd"}> : () -> ()
    %cst_15 = arith.constant dense<0.000000e+00> : vector<4x8x8xf32>
    %40 = tpu.matmul %39, %27, %cst_15 {dimension_numbers = #tpu.dot_dimension_numbers<[2], [1], [1], [2], [0, 0, 0, 1, 1, 2], [0], [0]>} : vector<4x8x8xbf16>, vector<4x8x8xbf16>, vector<4x8x8xf32> -> vector<4x8x8xf32>
    "tpu.trace_stop"() : () -> ()
    %41 = arith.truncf %40 : vector<4x8x8xf32> to vector<4x8x8xbf16>
    "tpu.trace_start"() <{level = 10 : i32, message = "hqd,hdn->hqn"}> : () -> ()
    %cst_16 = arith.constant dense<0.000000e+00> : vector<4x8x32xf32>
    %42 = tpu.matmul %41, %11, %cst_16 {dimension_numbers = #tpu.dot_dimension_numbers<[2], [1], [1], [2], [0, 0, 0, 1, 1, 2], [0], [0]>} : vector<4x8x8xbf16>, vector<4x8x32xbf16>, vector<4x8x32xf32> -> vector<4x8x32xf32>
    "tpu.trace_stop"() : () -> ()
    %cst_17 = arith.constant dense<0.000000e+00> : vector<8x32xf32>
    %43 = vector.multi_reduction <add>, %42, %cst_17 [0] : vector<4x8x32xf32> to vector<8x32xf32>
    %44 = vector.extract_strided_slice %15 {offsets = [8, 0], sizes = [8, 32], strides = [1, 1]} : vector<16x96xf32> to vector<8x32xf32>
    %45 = vector.shape_cast %44 : vector<8x32xf32> to vector<8x4x8xf32>
    %46 = tpu.transpose %45, [1, 0, 2] : vector<8x4x8xf32> -> vector<4x8x8xf32>
    %47 = arith.truncf %46 : vector<4x8x8xf32> to vector<4x8x8xbf16>
    %48 = vector.extract_strided_slice %15 {offsets = [8, 32], sizes = [8, 32], strides = [1, 1]} : vector<16x96xf32> to vector<8x32xf32>
    %49 = vector.shape_cast %48 : vector<8x32xf32> to vector<8x4x8xf32>
    %50 = tpu.transpose %49, [1, 0, 2] : vector<8x4x8xf32> -> vector<4x8x8xf32>
    %51 = arith.truncf %50 : vector<4x8x8xf32> to vector<4x8x8xbf16>
    %52 = vector.extract_strided_slice %15 {offsets = [8, 64], sizes = [8, 32], strides = [1, 1]} : vector<16x96xf32> to vector<8x32xf32>
    %53 = vector.shape_cast %52 : vector<8x32xf32> to vector<8x4x8xf32>
    %54 = tpu.transpose %53, [1, 0, 2] : vector<8x4x8xf32> -> vector<4x8x8xf32>
    %55 = arith.truncf %54 : vector<4x8x8xf32> to vector<4x8x8xbf16>
    "tpu.trace_start"() <{level = 10 : i32, message = "hqd,hkd->hqk"}> : () -> ()
    %cst_18 = arith.constant dense<0.000000e+00> : vector<4x8x8xf32>
    %56 = tpu.matmul %47, %51, %cst_18 {dimension_numbers = #tpu.dot_dimension_numbers<[2], [2], [1], [1], [0, 0, 0, 1, 1, 1], [0], [0]>} : vector<4x8x8xbf16>, vector<4x8x8xbf16>, vector<4x8x8xf32> -> vector<4x8x8xf32>
    "tpu.trace_stop"() : () -> ()
    %cst_19 = arith.constant dense<0xFF800000> : vector<4x8xf32>
    %57 = vector.multi_reduction <maximumf>, %56, %cst_19 [2] : vector<4x8x8xf32> to vector<4x8xf32>
    %58 = vector.shape_cast %57 : vector<4x8xf32> to vector<4x8x1xf32>
    %59 = vector.broadcast %58 : vector<4x8x1xf32> to vector<4x8x8xf32>
    %60 = arith.subf %56, %59 : vector<4x8x8xf32>
    %61 = math.exp %60 : vector<4x8x8xf32>
    %cst_20 = arith.constant dense<0.000000e+00> : vector<4x8xf32>
    %62 = vector.multi_reduction <add>, %61, %cst_20 [2] : vector<4x8x8xf32> to vector<4x8xf32>
    %63 = vector.shape_cast %62 : vector<4x8xf32> to vector<4x8x1xf32>
    %64 = tpu.reciprocal %63 : vector<4x8x1xf32> -> vector<4x8x1xf32>
    %65 = vector.broadcast %64 : vector<4x8x1xf32> to vector<4x8x8xf32>
    %66 = arith.mulf %61, %65 : vector<4x8x8xf32>
    %67 = arith.truncf %66 : vector<4x8x8xf32> to vector<4x8x8xbf16>
    "tpu.trace_start"() <{level = 10 : i32, message = "hqk,hkd->hqd"}> : () -> ()
    %cst_21 = arith.constant dense<0.000000e+00> : vector<4x8x8xf32>
    %68 = tpu.matmul %67, %55, %cst_21 {dimension_numbers = #tpu.dot_dimension_numbers<[2], [1], [1], [2], [0, 0, 0, 1, 1, 2], [0], [0]>} : vector<4x8x8xbf16>, vector<4x8x8xbf16>, vector<4x8x8xf32> -> vector<4x8x8xf32>
    "tpu.trace_stop"() : () -> ()
    %69 = arith.truncf %68 : vector<4x8x8xf32> to vector<4x8x8xbf16>
    "tpu.trace_start"() <{level = 10 : i32, message = "hqd,hdn->hqn"}> : () -> ()
    %cst_22 = arith.constant dense<0.000000e+00> : vector<4x8x32xf32>
    %70 = tpu.matmul %69, %11, %cst_22 {dimension_numbers = #tpu.dot_dimension_numbers<[2], [1], [1], [2], [0, 0, 0, 1, 1, 2], [0], [0]>} : vector<4x8x8xbf16>, vector<4x8x32xbf16>, vector<4x8x32xf32> -> vector<4x8x32xf32>
    "tpu.trace_stop"() : () -> ()
    %cst_23 = arith.constant dense<0.000000e+00> : vector<8x32xf32>
    %71 = vector.multi_reduction <add>, %70, %cst_23 [0] : vector<4x8x32xf32> to vector<8x32xf32>
    %72 = tpu.concatenate %43, %71 in 0 : vector<8x32xf32>, vector<8x32xf32> -> vector<16x32xf32>
    %73 = vector.broadcast %5 : vector<1x32xf32> to vector<16x32xf32>
    %74 = arith.addf %72, %73 : vector<16x32xf32>
    %75 = arith.addf %74, %0 : vector<16x32xf32>
    %cst_24 = arith.constant dense<0.000000e+00> : vector<16xf32>
    %76 = vector.multi_reduction <add>, %75, %cst_24 [1] : vector<16x32xf32> to vector<16xf32>
    %77 = vector.shape_cast %76 : vector<16xf32> to vector<16x1xf32>
    %cst_25 = arith.constant 3.200000e+01 : f32
    %78 = vector.broadcast %cst_25 : f32 to vector<16x1xf32>
    %79 = arith.divf %77, %78 : vector<16x1xf32>
    %80 = vector.broadcast %79 : vector<16x1xf32> to vector<16x32xf32>
    %81 = arith.subf %75, %80 : vector<16x32xf32>
    %82 = arith.mulf %81, %81 : vector<16x32xf32>
    %cst_26 = arith.constant dense<0.000000e+00> : vector<16xf32>
    %83 = vector.multi_reduction <add>, %82, %cst_26 [1] : vector<16x32xf32> to vector<16xf32>
    %84 = vector.shape_cast %83 : vector<16xf32> to vector<16x1xf32>
    %cst_27 = arith.constant 3.200000e+01 : f32
    %85 = vector.broadcast %cst_27 : f32 to vector<16x1xf32>
    %86 = arith.divf %84, %85 : vector<16x1xf32>
    %87 = vector.broadcast %79 : vector<16x1xf32> to vector<16x32xf32>
    %88 = arith.subf %75, %87 : vector<16x32xf32>
    %cst_28 = arith.constant 9.99999974E-6 : f32
    %89 = vector.broadcast %cst_28 : f32 to vector<16x1xf32>
    %90 = arith.addf %86, %89 : vector<16x1xf32>
    %91 = math.rsqrt %90 : vector<16x1xf32>
    %92 = vector.broadcast %91 : vector<16x1xf32> to vector<16x32xf32>
    %93 = arith.mulf %88, %92 : vector<16x32xf32>
    %94 = vector.broadcast %6 : vector<1x32xf32> to vector<16x32xf32>
    %95 = arith.mulf %93, %94 : vector<16x32xf32>
    %96 = vector.broadcast %7 : vector<1x32xf32> to vector<16x32xf32>
    %97 = arith.addf %95, %96 : vector<16x32xf32>
    %98 = arith.truncf %97 : vector<16x32xf32> to vector<16x32xbf16>
    %c0_29 = arith.constant 0 : index
    %c0_30 = arith.constant 0 : index
    %99 = vector.load %arg4[%c0_29, %c0_30] : memref<32x128xbf16, #tpu.memory_space<vmem>>, vector<32x128xbf16>
    %cst_31 = arith.constant dense<0.000000e+00> : vector<16x128xf32>
    %100 = tpu.matmul %98, %99, %cst_31 {dimension_numbers = #tpu.dot_dimension_numbers<[1], [0], [0], [1], [0, 0, 1, 1], [], []>} : vector<16x32xbf16>, vector<32x128xbf16>, vector<16x128xf32> -> vector<16x128xf32>
    %101 = vector.broadcast %3 : vector<1x128xf32> to vector<16x128xf32>
    %102 = arith.addf %100, %101 : vector<16x128xf32>
    %cst_32 = arith.constant 0.000000e+00 : f32
    %103 = vector.broadcast %cst_32 : f32 to vector<16x128xf32>
    %104 = arith.maximumf %102, %103 : vector<16x128xf32>
    %105 = arith.truncf %104 : vector<16x128xf32> to vector<16x128xbf16>
    %c0_33 = arith.constant 0 : index
    %c0_34 = arith.constant 0 : index
    %106 = vector.load %arg6[%c0_33, %c0_34] : memref<128x32xbf16, #tpu.memory_space<vmem>>, vector<128x32xbf16>
    %cst_35 = arith.constant dense<0.000000e+00> : vector<16x32xf32>
    %107 = tpu.matmul %105, %106, %cst_35 {dimension_numbers = #tpu.dot_dimension_numbers<[1], [0], [0], [1], [0, 0, 1, 1], [], []>} : vector<16x128xbf16>, vector<128x32xbf16>, vector<16x32xf32> -> vector<16x32xf32>
    %108 = vector.broadcast %8 : vector<1x32xf32> to vector<16x32xf32>
    %109 = arith.addf %107, %108 : vector<16x32xf32>
    %110 = arith.addf %109, %97 : vector<16x32xf32>
    %cst_36 = arith.constant dense<0.000000e+00> : vector<16xf32>
    %111 = vector.multi_reduction <add>, %110, %cst_36 [1] : vector<16x32xf32> to vector<16xf32>
    %112 = vector.shape_cast %111 : vector<16xf32> to vector<16x1xf32>
    %cst_37 = arith.constant 3.200000e+01 : f32
    %113 = vector.broadcast %cst_37 : f32 to vector<16x1xf32>
    %114 = arith.divf %112, %113 : vector<16x1xf32>
    %115 = vector.broadcast %114 : vector<16x1xf32> to vector<16x32xf32>
    %116 = arith.subf %110, %115 : vector<16x32xf32>
    %117 = arith.mulf %116, %116 : vector<16x32xf32>
    %cst_38 = arith.constant dense<0.000000e+00> : vector<16xf32>
    %118 = vector.multi_reduction <add>, %117, %cst_38 [1] : vector<16x32xf32> to vector<16xf32>
    %119 = vector.shape_cast %118 : vector<16xf32> to vector<16x1xf32>
    %cst_39 = arith.constant 3.200000e+01 : f32
    %120 = vector.broadcast %cst_39 : f32 to vector<16x1xf32>
    %121 = arith.divf %119, %120 : vector<16x1xf32>
    %122 = vector.broadcast %114 : vector<16x1xf32> to vector<16x32xf32>
    %123 = arith.subf %110, %122 : vector<16x32xf32>
    %cst_40 = arith.constant 9.99999974E-6 : f32
    %124 = vector.broadcast %cst_40 : f32 to vector<16x1xf32>
    %125 = arith.addf %121, %124 : vector<16x1xf32>
    %126 = math.rsqrt %125 : vector<16x1xf32>
    %127 = vector.broadcast %126 : vector<16x1xf32> to vector<16x32xf32>
    %128 = arith.mulf %123, %127 : vector<16x32xf32>
    %129 = vector.broadcast %9 : vector<1x32xf32> to vector<16x32xf32>
    %130 = arith.mulf %128, %129 : vector<16x32xf32>
    %131 = vector.broadcast %10 : vector<1x32xf32> to vector<16x32xf32>
    %132 = arith.addf %130, %131 : vector<16x32xf32>
    %c0_41 = arith.constant 0 : index
    %c0_42 = arith.constant 0 : index
    %133 = vector.load %arg8[%c0_41, %c0_42] : memref<16x32xf32, #tpu.memory_space<vmem>>, vector<16x32xf32>
    tpu.vector_store %arg8[%c0_41, %c0_42], %132 {strides = array<i32>} : memref<16x32xf32, #tpu.memory_space<vmem>>, vector<16x32xf32>,
    return
  }
}

</mosaic_0001>

<llo_original>
// kernel: tpu_custom_call.1
$region0: #{tpu_custom_call.1}
  #allocation0 [shape = 'u32[]', space=smem, size = 0x4, offset = 0x4, fixed_abs, tag = 'smem constant byte address 0x4 - core index']
  #allocation1 [shape = 'u32[144,128]{1,0:T(1,128)}', space=vmem, size = 0x12000, scoped, tag = 'internal scratch']
  %s0 = inlined_call_operand.vmem [shape: f32[16,32], index: 0, kind: input, shape index: {}]
  %s1 = inlined_call_operand.vmem [shape: bf16[32,96], index: 1, kind: input, shape index: {}]
  %s2 = inlined_call_operand.vmem [shape: f32[1,96], index: 2, kind: input, shape index: {}]
  %s3 = inlined_call_operand.vmem [shape: bf16[4,8,32], index: 3, kind: input, shape index: {}]
  %s4 = inlined_call_operand.vmem [shape: bf16[32,128], index: 4, kind: input, shape index: {}]
  %s5 = inlined_call_operand.vmem [shape: f32[1,128], index: 5, kind: input, shape index: {}]
  %s6 = inlined_call_operand.vmem [shape: bf16[128,32], index: 6, kind: input, shape index: {}]
  %s7 = inlined_call_operand.vmem [shape: f32[6,32], index: 7, kind: input, shape index: {}]
  %s8 = inlined_call_operand.hbm [shape: f32[16,32], index: 8, kind: output, shape index: {}]
  %s9 = sld [smem:[#allocation0]]
  $region42: #{tpu_custom_call.1} parent=0
    _
  %s11 = ssub.s32 1, %s9
  %s12 = scalar_select 0, %s11, %s9
  $region1: #{tpu_custom_call.1} parent=0
    #allocation2 [shape = 'u8[8192]{0}', space=vmem, size = 0x2000, scoped, tag = 'output window, operand 0, single buffered']
    #allocation3 [shape = 's32[1]{0}', space=sflag, size = 0x4, scoped, tag = 'scoped memory for tpu_custom_call.1']
    %13 = vsyncpa [#allocation3], 0
    // Predicated region
    $region2: #{tpu_custom_call.1} parent=1 // pred_check
      _
    $region3: #{tpu_custom_call.1} parent=1 // pred_check_branch
      %15 = sbr.rel (0) target = $region5
    $region4: #{tpu_custom_call.1} parent=1 // pred_region
      _
    $region5: #{tpu_custom_call.1} parent=1 // pred_fallthru
      _
    // Predicated region
    $region6: #{tpu_custom_call.1} parent=1 // pred_check
      _
    $region7: #{tpu_custom_call.1} parent=1 // pred_check_branch
      %17 = sbr.rel (0) target = $region9
    $region8: #{tpu_custom_call.1} parent=1 // pred_region
      _
    $region9: #{tpu_custom_call.1} parent=1 // pred_fallthru
      _
    // Predicated region
    $region10: #{tpu_custom_call.1} parent=1 // pred_check
      _
    $region11: #{tpu_custom_call.1} parent=1 // pred_check_branch
      %19 = sbr.rel (0) target = $region13
    $region12: #{tpu_custom_call.1} parent=1 // pred_region
      _
    $region13: #{tpu_custom_call.1} parent=1 // pred_fallthru
      _
    // Predicated region
    $region14: #{tpu_custom_call.1} parent=1 // pred_check
      _
    $region15: #{tpu_custom_call.1} parent=1 // pred_check_branch
      %21 = sbr.rel (0) target = $region17
    $region16: #{tpu_custom_call.1} parent=1 // pred_region
      _
    $region17: #{tpu_custom_call.1} parent=1 // pred_fallthru
      _
    // Predicated region
    $region18: #{tpu_custom_call.1} parent=1 // pred_check
      _
    $region19: #{tpu_custom_call.1} parent=1 // pred_check_branch
      %23 = sbr.rel (0) target = $region21
    $region20: #{tpu_custom_call.1} parent=1 // pred_region
      _
    $region21: #{tpu_custom_call.1} parent=1 // pred_fallthru
      _
    // Predicated region
    $region22: #{tpu_custom_call.1} parent=1 // pred_check
      _
    $region23: #{tpu_custom_call.1} parent=1 // pred_check_branch
      %25 = sbr.rel (0) target = $region25
    $region24: #{tpu_custom_call.1} parent=1 // pred_region
      _
    $region25: #{tpu_custom_call.1} parent=1 // pred_fallthru
      _
    // Predicated region
    $region26: #{tpu_custom_call.1} parent=1 // pred_check
      _
    $region27: #{tpu_custom_call.1} parent=1 // pred_check_branch
      %27 = sbr.rel (0) target = $region29
    $region28: #{tpu_custom_call.1} parent=1 // pred_region
      _
    $region29: #{tpu_custom_call.1} parent=1 // pred_fallthru
      _
    // Predicated region
    $region30: #{tpu_custom_call.1} parent=1 // pred_check
      _
    $region31: #{tpu_custom_call.1} parent=1 // pred_check_branch
      %29 = sbr.rel (0) target = $region33
    $region32: #{tpu_custom_call.1} parent=1 // pred_region
      _
    $region33: #{tpu_custom_call.1} parent=1 // pred_fallthru
      _
    %v31 = vld [vmem:[%s0] sm:$0xff]
    %v32 = vld [vmem:[%s0 + $0x8] sm:$0xff]
    %v33 = vpack.c.bf16 %v32, %v31
    %v34 = vld [vmem:[%s2] sm:$0x1]
    %v35 = vld [vmem:[%s5] sm:$0x1]
    %v36 = vld [vmem:[%s7] sm:$0x3f]
    %v37 = vld [vmem:[%s3] sm:$0xf]
    %v38 = vld [vmem:[%s3 + $0x4] sm:$0xf]
    %v39 = vld [vmem:[%s3 + $0x8] sm:$0xf]
    %v40 = vld [vmem:[%s3 + $0xc] sm:$0xf]
    %v41 = vld [vmem:[%s1] sm:$0xf]
    %v42 = vld [vmem:[%s1 + $0x4] sm:$0xf]
    %v43 = vld [vmem:[%s1 + $0x8] sm:$0xf]
    %v44 = vld [vmem:[%s1 + $0xc] sm:$0xf]
    %v46 = vlaneseq
    %v47 = vshrl.u32 %v46, 7
    %v48 = vsub.s32 0, %v47
    %v49 = vrot.slane %v34, %v48
    %v55 = vunpack.c.l.b16 %v41
    %v56 = vunpack.c.l.b16 %v42
    %v57 = vunpack.c.l.b16 %v43
    %v58 = vunpack.c.l.b16 %v44
    %v59 = vpack.c.b16 %v56, %v55
    %v60 = vpack.c.b16 %v58, %v57
    %vm63 = vcmask 261120
    %v65 = vsel %vm63, %v33, 0
    %67 = vmatprep.subr.bf16.mxu0 0
    %68 = vmatpush1.bf16.msra.mxu0 %v59
    %69 = vmatprep.subr.bf16.mxu0 0
    %70 = vmatpush1.bf16.msra.mxu0 %v60
    %71 = vmatprep.subr.bf16.mxu0 0
    %72 = vmatpush1.bf16.msra.mxu0 0
    %73 = vmatprep.subr.bf16.mxu0 0
    %74 = vmatpush1.bf16.msra.mxu0 0
    %75 = vmatprep.subr.bf16.mxu0 0
    %76 = vmatpush1.bf16.msra.mxu0 0
    %77 = vmatprep.subr.bf16.mxu0 0
    %78 = vmatpush1.bf16.msra.mxu0 0
    %79 = vmatprep.subr.bf16.mxu0 0
    %80 = vmatpush1.bf16.msra.mxu0 0
    %81 = vmatprep.subr.bf16.mxu0 0
    %82 = vmatpush1.bf16.msra.mxu0 0
    %83 = vmatprep.subr.bf16.mxu0 0
    %84 = vmatpush1.bf16.msra.mxu0 0
    %85 = vmatprep.subr.bf16.mxu0 0
    %86 = vmatpush1.bf16.msra.mxu0 0
    %87 = vmatprep.subr.bf16.mxu0 0
    %88 = vmatpush1.bf16.msra.mxu0 0
    %89 = vmatprep.subr.bf16.mxu0 0
    %90 = vmatpush1.bf16.msra.mxu0 0
    %91 = vmatprep.subr.bf16.mxu0 0
    %92 = vmatpush1.bf16.msra.mxu0 0
    %93 = vmatprep.subr.bf16.mxu0 0
    %94 = vmatpush1.bf16.msra.mxu0 0
    %95 = vmatprep.subr.bf16.mxu0 0
    %96 = vmatpush1.bf16.msra.mxu0 0
    %97 = vmatprep.subr.bf16.mxu0 0
    %98 = vmatpush1.bf16.msra.mxu0 0
    %99 = vmatprep.mubr.bf16.mxu0 0
    %100 = vmatmul.mubr.bf16.gmra.mrb[0].mxu0 %v65
    %v101 = vpop.f32.mrb[0].mxu0
    %v102 = vadd.f32 %v49, %v101
    %v103 = vpop.f32.mrb[0].mxu0
    %v104 = vpop.f32.mrb[0].mxu0
    %v105 = vadd.f32 %v49, %v104
    %v106 = vpop.f32.mrb[0].mxu0
    %107 = vdwg.mxu0
    %109 = vrot.lane.b32.xlu0 %v102, 120
    %v110 = vpop.permute.xlu0 %109
    %112 = vrot.lane.b32.xlu0 %v102, 112
    %v113 = vpop.permute.xlu0 %112
    %115 = vrot.lane.b32.xlu0 %v102, 104
    %v116 = vpop.permute.xlu0 %115
    %v118 = vcombine.low %v102, %v113
    %v119 = vcombine.high %v102, %v113
    %v121 = vunpack.c.l.s4 1983009808
    %v122 = vunpack.c.0.s8 %v121
    %v123 = vlaneseq
    %v124 = vshrl.u32 %v123, 7
    %v125 = vsub.s32 %v122, %v124
    %v126 = vrot.slane %v118, %v125
    %v128 = vunpack.c.l.s4 1983009808
    %v129 = vunpack.c.0.s8 %v128
    %v130 = vlaneseq
    %v131 = vshrl.u32 %v130, 7
    %v132 = vsub.s32 %v129, %v131
    %v133 = vrot.slane %v119, %v132
    %v134 = vcombine.low %v110, %v116
    %v135 = vcombine.high %v110, %v116
    %v137 = vunpack.c.l.s4 1983009808
    %v138 = vunpack.c.0.s8 %v137
    %v139 = vlaneseq
    %v140 = vshrl.u32 %v139, 7
    %v141 = vsub.s32 %v138, %v140
    %v142 = vrot.slane %v134, %v141
    %v144 = vunpack.c.l.s4 1983009808
    %v145 = vunpack.c.0.s8 %v144
    %v146 = vlaneseq
    %v147 = vshrl.u32 %v146, 7
    %v148 = vsub.s32 %v145, %v147
    %v149 = vrot.slane %v135, %v148
    %v150 = vcombine.low %v126, %v142
    %v151 = vcombine.high %v126, %v142
    %v153 = vunpack.c.l.s4 1934713408
    %v154 = vunpack.c.0.s8 %v153
    %v155 = vlaneseq
    %v156 = vshrl.u32 %v155, 7
    %v157 = vsub.s32 %v154, %v156
    %v158 = vrot.slane %v150, %v157
    %v160 = vunpack.c.l.s4 1934713408
    %v161 = vunpack.c.0.s8 %v160
    %v162 = vlaneseq
    %v163 = vshrl.u32 %v162, 7
    %v164 = vsub.s32 %v161, %v163
    %v165 = vrot.slane %v151, %v164
    %v166 = vcombine.low %v133, %v149
    %v167 = vcombine.high %v133, %v149
    %v169 = vunpack.c.l.s4 1934713408
    %v170 = vunpack.c.0.s8 %v169
    %v171 = vlaneseq
    %v172 = vshrl.u32 %v171, 7
    %v173 = vsub.s32 %v170, %v172
    %v174 = vrot.slane %v166, %v173
    %v176 = vunpack.c.l.s4 1934713408
    %v177 = vunpack.c.0.s8 %v176
    %v178 = vlaneseq
    %v179 = vshrl.u32 %v178, 7
    %v180 = vsub.s32 %v177, %v179
    %v181 = vrot.slane %v167, %v180
    %v182 = vcombine.high %v158, 0.0
    %v183 = vcombine.high %v165, 0.0
    %v184 = vcombine.high %v174, 0.0
    %v185 = vcombine.high %v181, 0.0
    %v186 = vcombine.low %v158, %v165
    %v188 = vunpack.c.l.s4 1983009808
    %v189 = vunpack.c.0.s8 %v188
    %v190 = vlaneseq
    %v191 = vshrl.u32 %v190, 7
    %v192 = vsub.s32 %v189, %v191
    %v193 = vrot.slane %v186, %v192
    %v194 = vcombine.low %v182, %v183
    %v196 = vunpack.c.l.s4 1983009808
    %v197 = vunpack.c.0.s8 %v196
    %v198 = vlaneseq
    %v199 = vshrl.u32 %v198, 7
    %v200 = vsub.s32 %v197, %v199
    %v201 = vrot.slane %v194, %v200
    %v202 = vcombine.low %v174, %v181
    %v204 = vunpack.c.l.s4 1983009808
    %v205 = vunpack.c.0.s8 %v204
    %v206 = vlaneseq
    %v207 = vshrl.u32 %v206, 7
    %v208 = vsub.s32 %v205, %v207
    %v209 = vrot.slane %v202, %v208
    %v210 = vcombine.low %v184, %v185
    %v212 = vunpack.c.l.s4 1983009808
    %v213 = vunpack.c.0.s8 %v212
    %v214 = vlaneseq
    %v215 = vshrl.u32 %v214, 7
    %v216 = vsub.s32 %v213, %v215
    %v217 = vrot.slane %v210, %v216
    %v218 = vcombine.low %v193, %v201
    %v219 = vcombine.high %v193, %v201
    %v221 = vunpack.c.l.s4 1934713408
    %v222 = vunpack.c.0.s8 %v221
    %v223 = vlaneseq
    %v224 = vshrl.u32 %v223, 7
    %v225 = vsub.s32 %v222, %v224
    %v226 = vrot.slane %v218, %v225
    %v228 = vunpack.c.l.s4 1934713408
    %v229 = vunpack.c.0.s8 %v228
    %v230 = vlaneseq
    %v231 = vshrl.u32 %v230, 7
    %v232 = vsub.s32 %v229, %v231
    %v233 = vrot.slane %v219, %v232
    %v234 = vcombine.low %v209, %v217
    %v235 = vcombine.high %v209, %v217
    %v237 = vunpack.c.l.s4 1934713408
    %v238 = vunpack.c.0.s8 %v237
    %v239 = vlaneseq
    %v240 = vshrl.u32 %v239, 7
    %v241 = vsub.s32 %v238, %v240
    %v242 = vrot.slane %v234, %v241
    %v244 = vunpack.c.l.s4 1934713408
    %v245 = vunpack.c.0.s8 %v244
    %v246 = vlaneseq
    %v247 = vshrl.u32 %v246, 7
    %v248 = vsub.s32 %v245, %v247
    %v249 = vrot.slane %v235, %v248
    %v250 = vcombine.low %v226, %v242
    %v251 = vcombine.high %v226, %v242
    %v252 = vcombine.low %v233, %v249
    %v253 = vcombine.high %v233, %v249
    %v254 = vpack.c.bf16 %v250, %v250
    %v255 = vpack.c.bf16 %v251, %v251
    %v256 = vpack.c.bf16 %v252, %v252
    %v257 = vpack.c.bf16 %v253, %v253
    %258 = vrot.lane.b32.xlu0 %v102, 96
    %v259 = vpop.permute.xlu0 %258
    %260 = vrot.lane.b32.xlu0 %v110, 96
    %v261 = vpop.permute.xlu0 %260
    %262 = vrot.lane.b32.xlu0 %v113, 96
    %v263 = vpop.permute.xlu0 %262
    %264 = vrot.lane.b32.xlu0 %v116, 96
    %v265 = vpop.permute.xlu0 %264
    %v270 = vcombine.low %v259, %v263
    %v271 = vcombine.high %v259, %v263
    %v273 = vunpack.c.l.s4 1983009808
    %v274 = vunpack.c.0.s8 %v273
    %v275 = vlaneseq
    %v276 = vshrl.u32 %v275, 7
    %v277 = vsub.s32 %v274, %v276
    %v278 = vrot.slane %v270, %v277
    %v280 = vunpack.c.l.s4 1983009808
    %v281 = vunpack.c.0.s8 %v280
    %v282 = vlaneseq
    %v283 = vshrl.u32 %v282, 7
    %v284 = vsub.s32 %v281, %v283
    %v285 = vrot.slane %v271, %v284
    %v286 = vcombine.low %v261, %v265
    %v287 = vcombine.high %v261, %v265
    %v289 = vunpack.c.l.s4 1983009808
    %v290 = vunpack.c.0.s8 %v289
    %v291 = vlaneseq
    %v292 = vshrl.u32 %v291, 7
    %v293 = vsub.s32 %v290, %v292
    %v294 = vrot.slane %v286, %v293
    %v296 = vunpack.c.l.s4 1983009808
    %v297 = vunpack.c.0.s8 %v296
    %v298 = vlaneseq
    %v299 = vshrl.u32 %v298, 7
    %v300 = vsub.s32 %v297, %v299
    %v301 = vrot.slane %v287, %v300
    %v302 = vcombine.low %v278, %v294
    %v303 = vcombine.high %v278, %v294
    %v305 = vunpack.c.l.s4 1934713408
    %v306 = vunpack.c.0.s8 %v305
    %v307 = vlaneseq
    %v308 = vshrl.u32 %v307, 7
    %v309 = vsub.s32 %v306, %v308
    %v310 = vrot.slane %v302, %v309
    %v312 = vunpack.c.l.s4 1934713408
    %v313 = vunpack.c.0.s8 %v312
    %v314 = vlaneseq
    %v315 = vshrl.u32 %v314, 7
    %v316 = vsub.s32 %v313, %v315
    %v317 = vrot.slane %v303, %v316
    %v318 = vcombine.low %v285, %v301
    %v319 = vcombine.high %v285, %v301
    %v321 = vunpack.c.l.s4 1934713408
    %v322 = vunpack.c.0.s8 %v321
    %v323 = vlaneseq
    %v324 = vshrl.u32 %v323, 7
    %v325 = vsub.s32 %v322, %v324
    %v326 = vrot.slane %v318, %v325
    %v328 = vunpack.c.l.s4 1934713408
    %v329 = vunpack.c.0.s8 %v328
    %v330 = vlaneseq
    %v331 = vshrl.u32 %v330, 7
    %v332 = vsub.s32 %v329, %v331
    %v333 = vrot.slane %v319, %v332
    %v334 = vcombine.high %v310, 0.0
    %v335 = vcombine.high %v317, 0.0
    %v336 = vcombine.high %v326, 0.0
    %v337 = vcombine.high %v333, 0.0
    %v338 = vcombine.low %v310, %v317
    %v340 = vunpack.c.l.s4 1983009808
    %v341 = vunpack.c.0.s8 %v340
    %v342 = vlaneseq
    %v343 = vshrl.u32 %v342, 7
    %v344 = vsub.s32 %v341, %v343
    %v345 = vrot.slane %v338, %v344
    %v346 = vcombine.low %v334, %v335
    %v348 = vunpack.c.l.s4 1983009808
    %v349 = vunpack.c.0.s8 %v348
    %v350 = vlaneseq
    %v351 = vshrl.u32 %v350, 7
    %v352 = vsub.s32 %v349, %v351
    %v353 = vrot.slane %v346, %v352
    %v354 = vcombine.low %v326, %v333
    %v356 = vunpack.c.l.s4 1983009808
    %v357 = vunpack.c.0.s8 %v356
    %v358 = vlaneseq
    %v359 = vshrl.u32 %v358, 7
    %v360 = vsub.s32 %v357, %v359
    %v361 = vrot.slane %v354, %v360
    %v362 = vcombine.low %v336, %v337
    %v364 = vunpack.c.l.s4 1983009808
    %v365 = vunpack.c.0.s8 %v364
    %v366 = vlaneseq
    %v367 = vshrl.u32 %v366, 7
    %v368 = vsub.s32 %v365, %v367
    %v369 = vrot.slane %v362, %v368
    %v370 = vcombine.low %v345, %v353
    %v371 = vcombine.high %v345, %v353
    %v373 = vunpack.c.l.s4 1934713408
    %v374 = vunpack.c.0.s8 %v373
    %v375 = vlaneseq
    %v376 = vshrl.u32 %v375, 7
    %v377 = vsub.s32 %v374, %v376
    %v378 = vrot.slane %v370, %v377
    %v380 = vunpack.c.l.s4 1934713408
    %v381 = vunpack.c.0.s8 %v380
    %v382 = vlaneseq
    %v383 = vshrl.u32 %v382, 7
    %v384 = vsub.s32 %v381, %v383
    %v385 = vrot.slane %v371, %v384
    %v386 = vcombine.low %v361, %v369
    %v387 = vcombine.high %v361, %v369
    %v389 = vunpack.c.l.s4 1934713408
    %v390 = vunpack.c.0.s8 %v389
    %v391 = vlaneseq
    %v392 = vshrl.u32 %v391, 7
    %v393 = vsub.s32 %v390, %v392
    %v394 = vrot.slane %v386, %v393
    %v396 = vunpack.c.l.s4 1934713408
    %v397 = vunpack.c.0.s8 %v396
    %v398 = vlaneseq
    %v399 = vshrl.u32 %v398, 7
    %v400 = vsub.s32 %v397, %v399
    %v401 = vrot.slane %v387, %v400
    %v402 = vcombine.low %v378, %v394
    %v403 = vcombine.high %v378, %v394
    %v404 = vcombine.low %v385, %v401
    %v405 = vcombine.high %v385, %v401
    %v406 = vpack.c.bf16 %v402, %v402
    %v407 = vpack.c.bf16 %v403, %v403
    %v408 = vpack.c.bf16 %v404, %v404
    %v409 = vpack.c.bf16 %v405, %v405
    %410 = vrot.lane.b32.xlu0 %v102, 64
    %v411 = vpop.permute.xlu0 %410
    %412 = vrot.lane.b32.xlu0 %v110, 64
    %v413 = vpop.permute.xlu0 %412
    %414 = vrot.lane.b32.xlu0 %v113, 64
    %v415 = vpop.permute.xlu0 %414
    %416 = vrot.lane.b32.xlu0 %v116, 64
    %v417 = vpop.permute.xlu0 %416
    %v422 = vcombine.low %v411, %v415
    %v423 = vcombine.high %v411, %v415
    %v425 = vunpack.c.l.s4 1983009808
    %v426 = vunpack.c.0.s8 %v425
    %v427 = vlaneseq
    %v428 = vshrl.u32 %v427, 7
    %v429 = vsub.s32 %v426, %v428
    %v430 = vrot.slane %v422, %v429
    %v432 = vunpack.c.l.s4 1983009808
    %v433 = vunpack.c.0.s8 %v432
    %v434 = vlaneseq
    %v435 = vshrl.u32 %v434, 7
    %v436 = vsub.s32 %v433, %v435
    %v437 = vrot.slane %v423, %v436
    %v438 = vcombine.low %v413, %v417
    %v439 = vcombine.high %v413, %v417
    %v441 = vunpack.c.l.s4 1983009808
    %v442 = vunpack.c.0.s8 %v441
    %v443 = vlaneseq
    %v444 = vshrl.u32 %v443, 7
    %v445 = vsub.s32 %v442, %v444
    %v446 = vrot.slane %v438, %v445
    %v448 = vunpack.c.l.s4 1983009808
    %v449 = vunpack.c.0.s8 %v448
    %v450 = vlaneseq
    %v451 = vshrl.u32 %v450, 7
    %v452 = vsub.s32 %v449, %v451
    %v453 = vrot.slane %v439, %v452
    %v454 = vcombine.low %v430, %v446
    %v455 = vcombine.high %v430, %v446
    %v457 = vunpack.c.l.s4 1934713408
    %v458 = vunpack.c.0.s8 %v457
    %v459 = vlaneseq
    %v460 = vshrl.u32 %v459, 7
    %v461 = vsub.s32 %v458, %v460
    %v462 = vrot.slane %v454, %v461
    %v464 = vunpack.c.l.s4 1934713408
    %v465 = vunpack.c.0.s8 %v464
    %v466 = vlaneseq
    %v467 = vshrl.u32 %v466, 7
    %v468 = vsub.s32 %v465, %v467
    %v469 = vrot.slane %v455, %v468
    %v470 = vcombine.low %v437, %v453
    %v471 = vcombine.high %v437, %v453
    %v473 = vunpack.c.l.s4 1934713408
    %v474 = vunpack.c.0.s8 %v473
    %v475 = vlaneseq
    %v476 = vshrl.u32 %v475, 7
    %v477 = vsub.s32 %v474, %v476
    %v478 = vrot.slane %v470, %v477
    %v480 = vunpack.c.l.s4 1934713408
    %v481 = vunpack.c.0.s8 %v480
    %v482 = vlaneseq
    %v483 = vshrl.u32 %v482, 7
    %v484 = vsub.s32 %v481, %v483
    %v485 = vrot.slane %v471, %v484
    %v486 = vcombine.high %v462, 0.0
    %v487 = vcombine.high %v469, 0.0
    %v488 = vcombine.high %v478, 0.0
    %v489 = vcombine.high %v485, 0.0
    %v490 = vcombine.low %v462, %v469
    %v492 = vunpack.c.l.s4 1983009808
    %v493 = vunpack.c.0.s8 %v492
    %v494 = vlaneseq
    %v495 = vshrl.u32 %v494, 7
    %v496 = vsub.s32 %v493, %v495
    %v497 = vrot.slane %v490, %v496
    %v498 = vcombine.low %v486, %v487
    %v500 = vunpack.c.l.s4 1983009808
    %v501 = vunpack.c.0.s8 %v500
    %v502 = vlaneseq
    %v503 = vshrl.u32 %v502, 7
    %v504 = vsub.s32 %v501, %v503
    %v505 = vrot.slane %v498, %v504
    %v506 = vcombine.low %v478, %v485
    %v508 = vunpack.c.l.s4 1983009808
    %v509 = vunpack.c.0.s8 %v508
    %v510 = vlaneseq
    %v511 = vshrl.u32 %v510, 7
    %v512 = vsub.s32 %v509, %v511
    %v513 = vrot.slane %v506, %v512
    %v514 = vcombine.low %v488, %v489
    %v516 = vunpack.c.l.s4 1983009808
    %v517 = vunpack.c.0.s8 %v516
    %v518 = vlaneseq
    %v519 = vshrl.u32 %v518, 7
    %v520 = vsub.s32 %v517, %v519
    %v521 = vrot.slane %v514, %v520
    %v522 = vcombine.low %v497, %v505
    %v523 = vcombine.high %v497, %v505
    %v525 = vunpack.c.l.s4 1934713408
    %v526 = vunpack.c.0.s8 %v525
    %v527 = vlaneseq
    %v528 = vshrl.u32 %v527, 7
    %v529 = vsub.s32 %v526, %v528
    %v530 = vrot.slane %v522, %v529
    %v532 = vunpack.c.l.s4 1934713408
    %v533 = vunpack.c.0.s8 %v532
    %v534 = vlaneseq
    %v535 = vshrl.u32 %v534, 7
    %v536 = vsub.s32 %v533, %v535
    %v537 = vrot.slane %v523, %v536
    %v538 = vcombine.low %v513, %v521
    %v539 = vcombine.high %v513, %v521
    %v541 = vunpack.c.l.s4 1934713408
    %v542 = vunpack.c.0.s8 %v541
    %v543 = vlaneseq
    %v544 = vshrl.u32 %v543, 7
    %v545 = vsub.s32 %v542, %v544
    %v546 = vrot.slane %v538, %v545
    %v548 = vunpack.c.l.s4 1934713408
    %v549 = vunpack.c.0.s8 %v548
    %v550 = vlaneseq
    %v551 = vshrl.u32 %v550, 7
    %v552 = vsub.s32 %v549, %v551
    %v553 = vrot.slane %v539, %v552
    %v554 = vcombine.low %v530, %v546
    %v555 = vcombine.high %v530, %v546
    %v556 = vcombine.low %v537, %v553
    %v557 = vcombine.high %v537, %v553
    %v558 = vpack.c.bf16 %v554, %v554
    %v559 = vpack.c.bf16 %v555, %v555
    %v560 = vpack.c.bf16 %v556, %v556
    %v561 = vpack.c.bf16 %v557, %v557
    %vm562 = vcmask 64512
    %v564 = vsel %vm562, %v254, 0
    %v567 = vsel %vm562, %v406, 0
    %569 = vmatprep.subr.bf16.mxu0 0
    %570 = vmatpush1.bf16.xpose.msra.mxu0 %v567
    %571 = vmatprep.subr.bf16.mxu0 0
    %572 = vmatpush1.bf16.xpose.msra.mxu0 0
    %573 = vmatprep.subr.bf16.mxu0 0
    %574 = vmatpush1.bf16.xpose.msra.mxu0 0
    %575 = vmatprep.subr.bf16.mxu0 0
    %576 = vmatpush1.bf16.xpose.msra.mxu0 0
    %577 = vmatprep.subr.bf16.mxu0 0
    %578 = vmatpush1.bf16.xpose.msra.mxu0 0
    %579 = vmatprep.subr.bf16.mxu0 0
    %580 = vmatpush1.bf16.xpose.msra.mxu0 0
    %581 = vmatprep.subr.bf16.mxu0 0
    %582 = vmatpush1.bf16.xpose.msra.mxu0 0
    %583 = vmatprep.subr.bf16.mxu0 0
    %584 = vmatpush1.bf16.xpose.msra.mxu0 0
    %585 = vmatprep.subr.bf16.mxu0 0
    %586 = vmatpush1.bf16.xpose.msra.mxu0 0
    %587 = vmatprep.subr.bf16.mxu0 0
    %588 = vmatpush1.bf16.xpose.msra.mxu0 0
    %589 = vmatprep.subr.bf16.mxu0 0
    %590 = vmatpush1.bf16.xpose.msra.mxu0 0
    %591 = vmatprep.subr.bf16.mxu0 0
    %592 = vmatpush1.bf16.xpose.msra.mxu0 0
    %593 = vmatprep.subr.bf16.mxu0 0
    %594 = vmatpush1.bf16.xpose.msra.mxu0 0
    %595 = vmatprep.subr.bf16.mxu0 0
    %596 = vmatpush1.bf16.xpose.msra.mxu0 0
    %597 = vmatprep.subr.bf16.mxu0 0
    %598 = vmatpush1.bf16.xpose.msra.mxu0 0
    %599 = vmatprep.subr.bf16.mxu0 0
    %600 = vmatpush1.bf16.xpose.msra.mxu0 0
    %601 = vmatprep.mubr.bf16.mxu0 0
    %602 = vmatmul.mubr.bf16.gmra.mrb[0].mxu0 %v564
    %v603 = vpop.f32.mrb[0].mxu0
    %v604 = vadd.f32 0.0, %v603
    %v605 = vpop.f32.mrb[0].mxu0
    %v606 = vpop.f32.mrb[0].mxu0
    %v607 = vpop.f32.mrb[0].mxu0
    %608 = vdwg.mxu0
    %v610 = vsel %vm562, %v255, 0
    %v613 = vsel %vm562, %v407, 0
    %615 = vmatprep.subr.bf16.mxu0 0
    %616 = vmatpush1.bf16.xpose.msra.mxu0 %v613
    %617 = vmatprep.subr.bf16.mxu0 0
    %618 = vmatpush1.bf16.xpose.msra.mxu0 0
    %619 = vmatprep.subr.bf16.mxu0 0
    %620 = vmatpush1.bf16.xpose.msra.mxu0 0
    %621 = vmatprep.subr.bf16.mxu0 0
    %622 = vmatpush1.bf16.xpose.msra.mxu0 0
    %623 = vmatprep.subr.bf16.mxu0 0
    %624 = vmatpush1.bf16.xpose.msra.mxu0 0
    %625 = vmatprep.subr.bf16.mxu0 0
    %626 = vmatpush1.bf16.xpose.msra.mxu0 0
    %627 = vmatprep.subr.bf16.mxu0 0
    %628 = vmatpush1.bf16.xpose.msra.mxu0 0
    %629 = vmatprep.subr.bf16.mxu0 0
    %630 = vmatpush1.bf16.xpose.msra.mxu0 0
    %631 = vmatprep.subr.bf16.mxu0 0
    %632 = vmatpush1.bf16.xpose.msra.mxu0 0
    %633 = vmatprep.subr.bf16.mxu0 0
    %634 = vmatpush1.bf16.xpose.msra.mxu0 0
    %635 = vmatprep.subr.bf16.mxu0 0
    %636 = vmatpush1.bf16.xpose.msra.mxu0 0
    %637 = vmatprep.subr.bf16.mxu0 0
    %638 = vmatpush1.bf16.xpose.msra.mxu0 0
    %639 = vmatprep.subr.bf16.mxu0 0
    %640 = vmatpush1.bf16.xpose.msra.mxu0 0
    %641 = vmatprep.subr.bf16.mxu0 0
    %642 = vmatpush1.bf16.xpose.msra.mxu0 0
    %643 = vmatprep.subr.bf16.mxu0 0
    %644 = vmatpush1.bf16.xpose.msra.mxu0 0
    %645 = vmatprep.subr.bf16.mxu0 0
    %646 = vmatpush1.bf16.xpose.msra.mxu0 0
    %647 = vmatprep.mubr.bf16.mxu0 0
    %648 = vmatmul.mubr.bf16.gmra.mrb[0].mxu0 %v610
    %v649 = vpop.f32.mrb[0].mxu0
    %v650 = vadd.f32 0.0, %v649
    %v651 = vpop.f32.mrb[0].mxu0
    %v652 = vpop.f32.mrb[0].mxu0
    %v653 = vpop.f32.mrb[0].mxu0
    %654 = vdwg.mxu0
    %v656 = vsel %vm562, %v256, 0
    %v659 = vsel %vm562, %v408, 0
    %661 = vmatprep.subr.bf16.mxu0 0
    %662 = vmatpush1.bf16.xpose.msra.mxu0 %v659
    %663 = vmatprep.subr.bf16.mxu0 0
    %664 = vmatpush1.bf16.xpose.msra.mxu0 0
    %665 = vmatprep.subr.bf16.mxu0 0
    %666 = vmatpush1.bf16.xpose.msra.mxu0 0
    %667 = vmatprep.subr.bf16.mxu0 0
    %668 = vmatpush1.bf16.xpose.msra.mxu0 0
    %669 = vmatprep.subr.bf16.mxu0 0
    %670 = vmatpush1.bf16.xpose.msra.mxu0 0
    %671 = vmatprep.subr.bf16.mxu0 0
    %672 = vmatpush1.bf16.xpose.msra.mxu0 0
    %673 = vmatprep.subr.bf16.mxu0 0
    %674 = vmatpush1.bf16.xpose.msra.mxu0 0
    %675 = vmatprep.subr.bf16.mxu0 0
    %676 = vmatpush1.bf16.xpose.msra.mxu0 0
    %677 = vmatprep.subr.bf16.mxu0 0
    %678 = vmatpush1.bf16.xpose.msra.mxu0 0
    %679 = vmatprep.subr.bf16.mxu0 0
    %680 = vmatpush1.bf16.xpose.msra.mxu0 0
    %681 = vmatprep.subr.bf16.mxu0 0
    %682 = vmatpush1.bf16.xpose.msra.mxu0 0
    %683 = vmatprep.subr.bf16.mxu0 0
    %684 = vmatpush1.bf16.xpose.msra.mxu0 0
    %685 = vmatprep.subr.bf16.mxu0 0
    %686 = vmatpush1.bf16.xpose.msra.mxu0 0
    %687 = vmatprep.subr.bf16.mxu0 0
    %688 = vmatpush1.bf16.xpose.msra.mxu0 0
    %689 = vmatprep.subr.bf16.mxu0 0
    %690 = vmatpush1.bf16.xpose.msra.mxu0 0
    %691 = vmatprep.subr.bf16.mxu0 0
    %692 = vmatpush1.bf16.xpose.msra.mxu0 0
    %693 = vmatprep.mubr.bf16.mxu0 0
    %694 = vmatmul.mubr.bf16.gmra.mrb[0].mxu0 %v656
    %v695 = vpop.f32.mrb[0].mxu0
    %v696 = vadd.f32 0.0, %v695
    %v697 = vpop.f32.mrb[0].mxu0
    %v698 = vpop.f32.mrb[0].mxu0
    %v699 = vpop.f32.mrb[0].mxu0
    %700 = vdwg.mxu0
    %v702 = vsel %vm562, %v257, 0
    %v705 = vsel %vm562, %v409, 0
    %707 = vmatprep.subr.bf16.mxu0 0
    %708 = vmatpush1.bf16.xpose.msra.mxu0 %v705
    %709 = vmatprep.subr.bf16.mxu0 0
    %710 = vmatpush1.bf16.xpose.msra.mxu0 0
    %711 = vmatprep.subr.bf16.mxu0 0
    %712 = vmatpush1.bf16.xpose.msra.mxu0 0
    %713 = vmatprep.subr.bf16.mxu0 0
    %714 = vmatpush1.bf16.xpose.msra.mxu0 0
    %715 = vmatprep.subr.bf16.mxu0 0
    %716 = vmatpush1.bf16.xpose.msra.mxu0 0
    %717 = vmatprep.subr.bf16.mxu0 0
    %718 = vmatpush1.bf16.xpose.msra.mxu0 0
    %719 = vmatprep.subr.bf16.mxu0 0
    %720 = vmatpush1.bf16.xpose.msra.mxu0 0
    %721 = vmatprep.subr.bf16.mxu0 0
    %722 = vmatpush1.bf16.xpose.msra.mxu0 0
    %723 = vmatprep.subr.bf16.mxu0 0
    %724 = vmatpush1.bf16.xpose.msra.mxu0 0
    %725 = vmatprep.subr.bf16.mxu0 0
    %726 = vmatpush1.bf16.xpose.msra.mxu0 0
    %727 = vmatprep.subr.bf16.mxu0 0
    %728 = vmatpush1.bf16.xpose.msra.mxu0 0
    %729 = vmatprep.subr.bf16.mxu0 0
    %730 = vmatpush1.bf16.xpose.msra.mxu0 0
    %731 = vmatprep.subr.bf16.mxu0 0
    %732 = vmatpush1.bf16.xpose.msra.mxu0 0
    %733 = vmatprep.subr.bf16.mxu0 0
    %734 = vmatpush1.bf16.xpose.msra.mxu0 0
    %735 = vmatprep.subr.bf16.mxu0 0
    %736 = vmatpush1.bf16.xpose.msra.mxu0 0
    %737 = vmatprep.subr.bf16.mxu0 0
    %738 = vmatpush1.bf16.xpose.msra.mxu0 0
    %739 = vmatprep.mubr.bf16.mxu0 0
    %740 = vmatmul.mubr.bf16.gmra.mrb[0].mxu0 %v702
    %v741 = vpop.f32.mrb[0].mxu0
    %v742 = vadd.f32 0.0, %v741
    %v743 = vpop.f32.mrb[0].mxu0
    %v744 = vpop.f32.mrb[0].mxu0
    %v745 = vpop.f32.mrb[0].mxu0
    %746 = vdwg.mxu0
    %v747 = vsel %vm562, %v604, -inf
    %748 = vmax.xlane.f32.xlu0 %v747
    %v749 = vpop.xlane.xlu0 %748
    %v750 = vsel %vm562, %v650, -inf
    %751 = vmax.xlane.f32.xlu0 %v750
    %v752 = vpop.xlane.xlu0 %751
    %v753 = vsel %vm562, %v696, -inf
    %754 = vmax.xlane.f32.xlu0 %v753
    %v755 = vpop.xlane.xlu0 %754
    %v756 = vsel %vm562, %v742, -inf
    %757 = vmax.xlane.f32.xlu0 %v756
    %v758 = vpop.xlane.xlu0 %757
    %v759 = vsub.f32 %v604, %v749
    %v760 = vsub.f32 %v650, %v752
    %v761 = vsub.f32 %v696, %v755
    %v762 = vsub.f32 %v742, %v758
    %v763 = vmul.f32 %v759, 1.442695
    %v764 = vpow.pop %v763
    %v765 = vmul.f32 %v760, 1.442695
    %v766 = vpow.pop %v765
    %v767 = vmul.f32 %v761, 1.442695
    %v768 = vpow.pop %v767
    %v769 = vmul.f32 %v762, 1.442695
    %v770 = vpow.pop %v769
    %v771 = vsel %vm562, %v764, 0.0
    %772 = vadd.xlane.f32.xlu0 %v771
    %v773 = vpop.xlane.xlu0 %772
    %v774 = vsel %vm562, %v766, 0.0
    %775 = vadd.xlane.f32.xlu0 %v774
    %v776 = vpop.xlane.xlu0 %775
    %v777 = vsel %vm562, %v768, 0.0
    %778 = vadd.xlane.f32.xlu0 %v777
    %v779 = vpop.xlane.xlu0 %778
    %v780 = vsel %vm562, %v770, 0.0
    %781 = vadd.xlane.f32.xlu0 %v780
    %v782 = vpop.xlane.xlu0 %781
    %v783 = vrcp.pop %v773
    %v784 = vrcp.pop %v776
    %v785 = vrcp.pop %v779
    %v786 = vrcp.pop %v782
    %v787 = vmul.f32 %v764, %v783
    %v788 = vmul.f32 %v766, %v784
    %v789 = vmul.f32 %v768, %v785
    %v790 = vmul.f32 %v770, %v786
    %v791 = vpack.c.bf16 %v787, %v787
    %v792 = vpack.c.bf16 %v788, %v788
    %v793 = vpack.c.bf16 %v789, %v789
    %v794 = vpack.c.bf16 %v790, %v790
    %v796 = vsel %vm562, %v791, 0
    %vm798 = vcmask 1043456
    %v800 = vsel %vm798, %v558, 0
    %802 = vmatprep.subr.bf16.mxu0 0
    %803 = vmatpush1.bf16.msra.mxu0 %v800
    %804 = vmatprep.subr.bf16.mxu0 0
    %805 = vmatpush1.bf16.msra.mxu0 0
    %806 = vmatprep.subr.bf16.mxu0 0
    %807 = vmatpush1.bf16.msra.mxu0 0
    %808 = vmatprep.subr.bf16.mxu0 0
    %809 = vmatpush1.bf16.msra.mxu0 0
    %810 = vmatprep.subr.bf16.mxu0 0
    %811 = vmatpush1.bf16.msra.mxu0 0
    %812 = vmatprep.subr.bf16.mxu0 0
    %813 = vmatpush1.bf16.msra.mxu0 0
    %814 = vmatprep.subr.bf16.mxu0 0
    %815 = vmatpush1.bf16.msra.mxu0 0
    %816 = vmatprep.subr.bf16.mxu0 0
    %817 = vmatpush1.bf16.msra.mxu0 0
    %818 = vmatprep.subr.bf16.mxu0 0
    %819 = vmatpush1.bf16.msra.mxu0 0
    %820 = vmatprep.subr.bf16.mxu0 0
    %821 = vmatpush1.bf16.msra.mxu0 0
    %822 = vmatprep.subr.bf16.mxu0 0
    %823 = vmatpush1.bf16.msra.mxu0 0
    %824 = vmatprep.subr.bf16.mxu0 0
    %825 = vmatpush1.bf16.msra.mxu0 0
    %826 = vmatprep.subr.bf16.mxu0 0
    %827 = vmatpush1.bf16.msra.mxu0 0
    %828 = vmatprep.subr.bf16.mxu0 0
    %829 = vmatpush1.bf16.msra.mxu0 0
    %830 = vmatprep.subr.bf16.mxu0 0
    %831 = vmatpush1.bf16.msra.mxu0 0
    %832 = vmatprep.subr.bf16.mxu0 0
    %833 = vmatpush1.bf16.msra.mxu0 0
    %834 = vmatprep.mubr.bf16.mxu0 0
    %835 = vmatmul.mubr.bf16.gmra.mrb[0].mxu0 %v796
    %v836 = vpop.f32.mrb[0].mxu0
    %v837 = vadd.f32 0.0, %v836
    %v838 = vpop.f32.mrb[0].mxu0
    %v839 = vpop.f32.mrb[0].mxu0
    %v840 = vpop.f32.mrb[0].mxu0
    %841 = vdwg.mxu0
    %v843 = vsel %vm562, %v792, 0
    %v846 = vsel %vm798, %v559, 0
    %848 = vmatprep.subr.bf16.mxu0 0
    %849 = vmatpush1.bf16.msra.mxu0 %v846
    %850 = vmatprep.subr.bf16.mxu0 0
    %851 = vmatpush1.bf16.msra.mxu0 0
    %852 = vmatprep.subr.bf16.mxu0 0
    %853 = vmatpush1.bf16.msra.mxu0 0
    %854 = vmatprep.subr.bf16.mxu0 0
    %855 = vmatpush1.bf16.msra.mxu0 0
    %856 = vmatprep.subr.bf16.mxu0 0
    %857 = vmatpush1.bf16.msra.mxu0 0
    %858 = vmatprep.subr.bf16.mxu0 0
    %859 = vmatpush1.bf16.msra.mxu0 0
    %860 = vmatprep.subr.bf16.mxu0 0
    %861 = vmatpush1.bf16.msra.mxu0 0
    %862 = vmatprep.subr.bf16.mxu0 0
    %863 = vmatpush1.bf16.msra.mxu0 0
    %864 = vmatprep.subr.bf16.mxu0 0
    %865 = vmatpush1.bf16.msra.mxu0 0
    %866 = vmatprep.subr.bf16.mxu0 0
    %867 = vmatpush1.bf16.msra.mxu0 0
    %868 = vmatprep.subr.bf16.mxu0 0
    %869 = vmatpush1.bf16.msra.mxu0 0
    %870 = vmatprep.subr.bf16.mxu0 0
    %871 = vmatpush1.bf16.msra.mxu0 0
    %872 = vmatprep.subr.bf16.mxu0 0
    %873 = vmatpush1.bf16.msra.mxu0 0
    %874 = vmatprep.subr.bf16.mxu0 0
    %875 = vmatpush1.bf16.msra.mxu0 0
    %876 = vmatprep.subr.bf16.mxu0 0
    %877 = vmatpush1.bf16.msra.mxu0 0
    %878 = vmatprep.subr.bf16.mxu0 0
    %879 = vmatpush1.bf16.msra.mxu0 0
    %880 = vmatprep.mubr.bf16.mxu0 0
    %881 = vmatmul.mubr.bf16.gmra.mrb[0].mxu0 %v843
    %v882 = vpop.f32.mrb[0].mxu0
    %v883 = vadd.f32 0.0, %v882
    %v884 = vpop.f32.mrb[0].mxu0
    %v885 = vpop.f32.mrb[0].mxu0
    %v886 = vpop.f32.mrb[0].mxu0
    %887 = vdwg.mxu0
    %v889 = vsel %vm562, %v793, 0
    %v892 = vsel %vm798, %v560, 0
    %894 = vmatprep.subr.bf16.mxu0 0
    %895 = vmatpush1.bf16.msra.mxu0 %v892
    %896 = vmatprep.subr.bf16.mxu0 0
    %897 = vmatpush1.bf16.msra.mxu0 0
    %898 = vmatprep.subr.bf16.mxu0 0
    %899 = vmatpush1.bf16.msra.mxu0 0
    %900 = vmatprep.subr.bf16.mxu0 0
    %901 = vmatpush1.bf16.msra.mxu0 0
    %902 = vmatprep.subr.bf16.mxu0 0
    %903 = vmatpush1.bf16.msra.mxu0 0
    %904 = vmatprep.subr.bf16.mxu0 0
    %905 = vmatpush1.bf16.msra.mxu0 0
    %906 = vmatprep.subr.bf16.mxu0 0
    %907 = vmatpush1.bf16.msra.mxu0 0
    %908 = vmatprep.subr.bf16.mxu0 0
    %909 = vmatpush1.bf16.msra.mxu0 0
    %910 = vmatprep.subr.bf16.mxu0 0
    %911 = vmatpush1.bf16.msra.mxu0 0
    %912 = vmatprep.subr.bf16.mxu0 0
    %913 = vmatpush1.bf16.msra.mxu0 0
    %914 = vmatprep.subr.bf16.mxu0 0
    %915 = vmatpush1.bf16.msra.mxu0 0
    %916 = vmatprep.subr.bf16.mxu0 0
    %917 = vmatpush1.bf16.msra.mxu0 0
    %918 = vmatprep.subr.bf16.mxu0 0
    %919 = vmatpush1.bf16.msra.mxu0 0
    %920 = vmatprep.subr.bf16.mxu0 0
    %921 = vmatpush1.bf16.msra.mxu0 0
    %922 = vmatprep.subr.bf16.mxu0 0
    %923 = vmatpush1.bf16.msra.mxu0 0
    %924 = vmatprep.subr.bf16.mxu0 0
    %925 = vmatpush1.bf16.msra.mxu0 0
    %926 = vmatprep.mubr.bf16.mxu0 0
    %927 = vmatmul.mubr.bf16.gmra.mrb[0].mxu0 %v889
    %v928 = vpop.f32.mrb[0].mxu0
    %v929 = vadd.f32 0.0, %v928
    %v930 = vpop.f32.mrb[0].mxu0
    %v931 = vpop.f32.mrb[0].mxu0
    %v932 = vpop.f32.mrb[0].mxu0
    %933 = vdwg.mxu0
    %v935 = vsel %vm562, %v794, 0
    %v938 = vsel %vm798, %v561, 0
    %940 = vmatprep.subr.bf16.mxu0 0
    %941 = vmatpush1.bf16.msra.mxu0 %v938
    %942 = vmatprep.subr.bf16.mxu0 0
    %943 = vmatpush1.bf16.msra.mxu0 0
    %944 = vmatprep.subr.bf16.mxu0 0
    %945 = vmatpush1.bf16.msra.mxu0 0
    %946 = vmatprep.subr.bf16.mxu0 0
    %947 = vmatpush1.bf16.msra.mxu0 0
    %948 = vmatprep.subr.bf16.mxu0 0
    %949 = vmatpush1.bf16.msra.mxu0 0
    %950 = vmatprep.subr.bf16.mxu0 0
    %951 = vmatpush1.bf16.msra.mxu0 0
    %952 = vmatprep.subr.bf16.mxu0 0
    %953 = vmatpush1.bf16.msra.mxu0 0
    %954 = vmatprep.subr.bf16.mxu0 0
    %955 = vmatpush1.bf16.msra.mxu0 0
    %956 = vmatprep.subr.bf16.mxu0 0
    %957 = vmatpush1.bf16.msra.mxu0 0
    %958 = vmatprep.subr.bf16.mxu0 0
    %959 = vmatpush1.bf16.msra.mxu0 0
    %960 = vmatprep.subr.bf16.mxu0 0
    %961 = vmatpush1.bf16.msra.mxu0 0
    %962 = vmatprep.subr.bf16.mxu0 0
    %963 = vmatpush1.bf16.msra.mxu0 0
    %964 = vmatprep.subr.bf16.mxu0 0
    %965 = vmatpush1.bf16.msra.mxu0 0
    %966 = vmatprep.subr.bf16.mxu0 0
    %967 = vmatpush1.bf16.msra.mxu0 0
    %968 = vmatprep.subr.bf16.mxu0 0
    %969 = vmatpush1.bf16.msra.mxu0 0
    %970 = vmatprep.subr.bf16.mxu0 0
    %971 = vmatpush1.bf16.msra.mxu0 0
    %972 = vmatprep.mubr.bf16.mxu0 0
    %973 = vmatmul.mubr.bf16.gmra.mrb[0].mxu0 %v935
    %v974 = vpop.f32.mrb[0].mxu0
    %v975 = vadd.f32 0.0, %v974
    %v976 = vpop.f32.mrb[0].mxu0
    %v977 = vpop.f32.mrb[0].mxu0
    %v978 = vpop.f32.mrb[0].mxu0
    %979 = vdwg.mxu0
    %v980 = vpack.c.bf16 %v837, %v837
    %v981 = vpack.c.bf16 %v883, %v883
    %v982 = vpack.c.bf16 %v929, %v929
    %v983 = vpack.c.bf16 %v975, %v975
    %v985 = vsel %vm562, %v980, 0
    %v988 = vsel %vm798, %v37, 0
    %990 = vmatprep.subr.bf16.mxu0 0
    %991 = vmatpush1.bf16.msra.mxu0 %v988
    %992 = vmatprep.subr.bf16.mxu0 0
    %993 = vmatpush1.bf16.msra.mxu0 0
    %994 = vmatprep.subr.bf16.mxu0 0
    %995 = vmatpush1.bf16.msra.mxu0 0
    %996 = vmatprep.subr.bf16.mxu0 0
    %997 = vmatpush1.bf16.msra.mxu0 0
    %998 = vmatprep.subr.bf16.mxu0 0
    %999 = vmatpush1.bf16.msra.mxu0 0
    %1000 = vmatprep.subr.bf16.mxu0 0
    %1001 = vmatpush1.bf16.msra.mxu0 0
    %1002 = vmatprep.subr.bf16.mxu0 0
    %1003 = vmatpush1.bf16.msra.mxu0 0
    %1004 = vmatprep.subr.bf16.mxu0 0
    %1005 = vmatpush1.bf16.msra.mxu0 0
    %1006 = vmatprep.subr.bf16.mxu0 0
    %1007 = vmatpush1.bf16.msra.mxu0 0
    %1008 = vmatprep.subr.bf16.mxu0 0
    %1009 = vmatpush1.bf16.msra.mxu0 0
    %1010 = vmatprep.subr.bf16.mxu0 0
    %1011 = vmatpush1.bf16.msra.mxu0 0
    %1012 = vmatprep.subr.bf16.mxu0 0
    %1013 = vmatpush1.bf16.msra.mxu0 0
    %1014 = vmatprep.subr.bf16.mxu0 0
    %1015 = vmatpush1.bf16.msra.mxu0 0
    %1016 = vmatprep.subr.bf16.mxu0 0
    %1017 = vmatpush1.bf16.msra.mxu0 0
    %1018 = vmatprep.subr.bf16.mxu0 0
    %1019 = vmatpush1.bf16.msra.mxu0 0
    %1020 = vmatprep.subr.bf16.mxu0 0
    %1021 = vmatpush1.bf16.msra.mxu0 0
    %1022 = vmatprep.mubr.bf16.mxu0 0
    %1023 = vmatmul.mubr.bf16.gmra.mrb[0].mxu0 %v985
    %v1024 = vpop.f32.mrb[0].mxu0
    %v1025 = vadd.f32 0.0, %v1024
    %v1026 = vpop.f32.mrb[0].mxu0
    %v1027 = vpop.f32.mrb[0].mxu0
    %v1028 = vpop.f32.mrb[0].mxu0
    %1029 = vdwg.mxu0
    %v1031 = vsel %vm562, %v981, 0
    %v1034 = vsel %vm798, %v38, 0
    %1036 = vmatprep.subr.bf16.mxu0 0
    %1037 = vmatpush1.bf16.msra.mxu0 %v1034
    %1038 = vmatprep.subr.bf16.mxu0 0
    %1039 = vmatpush1.bf16.msra.mxu0 0
    %1040 = vmatprep.subr.bf16.mxu0 0
    %1041 = vmatpush1.bf16.msra.mxu0 0
    %1042 = vmatprep.subr.bf16.mxu0 0
    %1043 = vmatpush1.bf16.msra.mxu0 0
    %1044 = vmatprep.subr.bf16.mxu0 0
    %1045 = vmatpush1.bf16.msra.mxu0 0
    %1046 = vmatprep.subr.bf16.mxu0 0
    %1047 = vmatpush1.bf16.msra.mxu0 0
    %1048 = vmatprep.subr.bf16.mxu0 0
    %1049 = vmatpush1.bf16.msra.mxu0 0
    %1050 = vmatprep.subr.bf16.mxu0 0
    %1051 = vmatpush1.bf16.msra.mxu0 0
    %1052 = vmatprep.subr.bf16.mxu0 0
    %1053 = vmatpush1.bf16.msra.mxu0 0
    %1054 = vmatprep.subr.bf16.mxu0 0
    %1055 = vmatpush1.bf16.msra.mxu0 0
    %1056 = vmatprep.subr.bf16.mxu0 0
    %1057 = vmatpush1.bf16.msra.mxu0 0
    %1058 = vmatprep.subr.bf16.mxu0 0
    %1059 = vmatpush1.bf16.msra.mxu0 0
    %1060 = vmatprep.subr.bf16.mxu0 0
    %1061 = vmatpush1.bf16.msra.mxu0 0
    %1062 = vmatprep.subr.bf16.mxu0 0
    %1063 = vmatpush1.bf16.msra.mxu0 0
    %1064 = vmatprep.subr.bf16.mxu0 0
    %1065 = vmatpush1.bf16.msra.mxu0 0
    %1066 = vmatprep.subr.bf16.mxu0 0
    %1067 = vmatpush1.bf16.msra.mxu0 0
    %1068 = vmatprep.mubr.bf16.mxu0 0
    %1069 = vmatmul.mubr.bf16.gmra.mrb[0].mxu0 %v1031
    %v1070 = vpop.f32.mrb[0].mxu0
    %v1071 = vadd.f32 0.0, %v1070
    %v1072 = vpop.f32.mrb[0].mxu0
    %v1073 = vpop.f32.mrb[0].mxu0
    %v1074 = vpop.f32.mrb[0].mxu0
    %1075 = vdwg.mxu0
    %v1077 = vsel %vm562, %v982, 0
    %v1080 = vsel %vm798, %v39, 0
    %1082 = vmatprep.subr.bf16.mxu0 0
    %1083 = vmatpush1.bf16.msra.mxu0 %v1080
    %1084 = vmatprep.subr.bf16.mxu0 0
    %1085 = vmatpush1.bf16.msra.mxu0 0
    %1086 = vmatprep.subr.bf16.mxu0 0
    %1087 = vmatpush1.bf16.msra.mxu0 0
    %1088 = vmatprep.subr.bf16.mxu0 0
    %1089 = vmatpush1.bf16.msra.mxu0 0
    %1090 = vmatprep.subr.bf16.mxu0 0
    %1091 = vmatpush1.bf16.msra.mxu0 0
    %1092 = vmatprep.subr.bf16.mxu0 0
    %1093 = vmatpush1.bf16.msra.mxu0 0
    %1094 = vmatprep.subr.bf16.mxu0 0
    %1095 = vmatpush1.bf16.msra.mxu0 0
    %1096 = vmatprep.subr.bf16.mxu0 0
    %1097 = vmatpush1.bf16.msra.mxu0 0
    %1098 = vmatprep.subr.bf16.mxu0 0
    %1099 = vmatpush1.bf16.msra.mxu0 0
    %1100 = vmatprep.subr.bf16.mxu0 0
    %1101 = vmatpush1.bf16.msra.mxu0 0
    %1102 = vmatprep.subr.bf16.mxu0 0
    %1103 = vmatpush1.bf16.msra.mxu0 0
    %1104 = vmatprep.subr.bf16.mxu0 0
    %1105 = vmatpush1.bf16.msra.mxu0 0
    %1106 = vmatprep.subr.bf16.mxu0 0
    %1107 = vmatpush1.bf16.msra.mxu0 0
    %1108 = vmatprep.subr.bf16.mxu0 0
    %1109 = vmatpush1.bf16.msra.mxu0 0
    %1110 = vmatprep.subr.bf16.mxu0 0
    %1111 = vmatpush1.bf16.msra.mxu0 0
    %1112 = vmatprep.subr.bf16.mxu0 0
    %1113 = vmatpush1.bf16.msra.mxu0 0
    %1114 = vmatprep.mubr.bf16.mxu0 0
    %1115 = vmatmul.mubr.bf16.gmra.mrb[0].mxu0 %v1077
    %v1116 = vpop.f32.mrb[0].mxu0
    %v1117 = vadd.f32 0.0, %v1116
    %v1118 = vpop.f32.mrb[0].mxu0
    %v1119 = vpop.f32.mrb[0].mxu0
    %v1120 = vpop.f32.mrb[0].mxu0
    %1121 = vdwg.mxu0
    %v1123 = vsel %vm562, %v983, 0
    %v1126 = vsel %vm798, %v40, 0
    %1128 = vmatprep.subr.bf16.mxu0 0
    %1129 = vmatpush1.bf16.msra.mxu0 %v1126
    %1130 = vmatprep.subr.bf16.mxu0 0
    %1131 = vmatpush1.bf16.msra.mxu0 0
    %1132 = vmatprep.subr.bf16.mxu0 0
    %1133 = vmatpush1.bf16.msra.mxu0 0
    %1134 = vmatprep.subr.bf16.mxu0 0
    %1135 = vmatpush1.bf16.msra.mxu0 0
    %1136 = vmatprep.subr.bf16.mxu0 0
    %1137 = vmatpush1.bf16.msra.mxu0 0
    %1138 = vmatprep.subr.bf16.mxu0 0
    %1139 = vmatpush1.bf16.msra.mxu0 0
    %1140 = vmatprep.subr.bf16.mxu0 0
    %1141 = vmatpush1.bf16.msra.mxu0 0
    %1142 = vmatprep.subr.bf16.mxu0 0
    %1143 = vmatpush1.bf16.msra.mxu0 0
    %1144 = vmatprep.subr.bf16.mxu0 0
    %1145 = vmatpush1.bf16.msra.mxu0 0
    %1146 = vmatprep.subr.bf16.mxu0 0
    %1147 = vmatpush1.bf16.msra.mxu0 0
    %1148 = vmatprep.subr.bf16.mxu0 0
    %1149 = vmatpush1.bf16.msra.mxu0 0
    %1150 = vmatprep.subr.bf16.mxu0 0
    %1151 = vmatpush1.bf16.msra.mxu0 0
    %1152 = vmatprep.subr.bf16.mxu0 0
    %1153 = vmatpush1.bf16.msra.mxu0 0
    %1154 = vmatprep.subr.bf16.mxu0 0
    %1155 = vmatpush1.bf16.msra.mxu0 0
    %1156 = vmatprep.subr.bf16.mxu0 0
    %1157 = vmatpush1.bf16.msra.mxu0 0
    %1158 = vmatprep.subr.bf16.mxu0 0
    %1159 = vmatpush1.bf16.msra.mxu0 0
    %1160 = vmatprep.mubr.bf16.mxu0 0
    %1161 = vmatmul.mubr.bf16.gmra.mrb[0].mxu0 %v1123
    %v1162 = vpop.f32.mrb[0].mxu0
    %v1163 = vadd.f32 0.0, %v1162
    %v1164 = vpop.f32.mrb[0].mxu0
    %v1165 = vpop.f32.mrb[0].mxu0
    %v1166 = vpop.f32.mrb[0].mxu0
    %1167 = vdwg.mxu0
    %v1168 = vsel %vm63, %v1025, 0.0
    %v1169 = vsel %vm63, %v1071, 0.0
    %v1170 = vadd.f32 %v1168, %v1169
    %v1171 = vsel %vm63, %v1117, 0.0
    %v1172 = vadd.f32 %v1170, %v1171
    %v1173 = vsel %vm63, %v1163, 0.0
    %v1174 = vadd.f32 %v1172, %v1173
    %1176 = vrot.lane.b32.xlu0 %v105, 120
    %v1177 = vpop.permute.xlu0 %1176
    %1179 = vrot.lane.b32.xlu0 %v105, 112
    %v1180 = vpop.permute.xlu0 %1179
    %1182 = vrot.lane.b32.xlu0 %v105, 104
    %v1183 = vpop.permute.xlu0 %1182
    %v1185 = vcombine.low %v105, %v1180
    %v1186 = vcombine.high %v105, %v1180
    %v1188 = vunpack.c.l.s4 1983009808
    %v1189 = vunpack.c.0.s8 %v1188
    %v1190 = vlaneseq
    %v1191 = vshrl.u32 %v1190, 7
    %v1192 = vsub.s32 %v1189, %v1191
    %v1193 = vrot.slane %v1185, %v1192
    %v1195 = vunpack.c.l.s4 1983009808
    %v1196 = vunpack.c.0.s8 %v1195
    %v1197 = vlaneseq
    %v1198 = vshrl.u32 %v1197, 7
    %v1199 = vsub.s32 %v1196, %v1198
    %v1200 = vrot.slane %v1186, %v1199
    %v1201 = vcombine.low %v1177, %v1183
    %v1202 = vcombine.high %v1177, %v1183
    %v1204 = vunpack.c.l.s4 1983009808
    %v1205 = vunpack.c.0.s8 %v1204
    %v1206 = vlaneseq
    %v1207 = vshrl.u32 %v1206, 7
    %v1208 = vsub.s32 %v1205, %v1207
    %v1209 = vrot.slane %v1201, %v1208
    %v1211 = vunpack.c.l.s4 1983009808
    %v1212 = vunpack.c.0.s8 %v1211
    %v1213 = vlaneseq
    %v1214 = vshrl.u32 %v1213, 7
    %v1215 = vsub.s32 %v1212, %v1214
    %v1216 = vrot.slane %v1202, %v1215
    %v1217 = vcombine.low %v1193, %v1209
    %v1218 = vcombine.high %v1193, %v1209
    %v1220 = vunpack.c.l.s4 1934713408
    %v1221 = vunpack.c.0.s8 %v1220
    %v1222 = vlaneseq
    %v1223 = vshrl.u32 %v1222, 7
    %v1224 = vsub.s32 %v1221, %v1223
    %v1225 = vrot.slane %v1217, %v1224
    %v1227 = vunpack.c.l.s4 1934713408
    %v1228 = vunpack.c.0.s8 %v1227
    %v1229 = vlaneseq
    %v1230 = vshrl.u32 %v1229, 7
    %v1231 = vsub.s32 %v1228, %v1230
    %v1232 = vrot.slane %v1218, %v1231
    %v1233 = vcombine.low %v1200, %v1216
    %v1234 = vcombine.high %v1200, %v1216
    %v1236 = vunpack.c.l.s4 1934713408
    %v1237 = vunpack.c.0.s8 %v1236
    %v1238 = vlaneseq
    %v1239 = vshrl.u32 %v1238, 7
    %v1240 = vsub.s32 %v1237, %v1239
    %v1241 = vrot.slane %v1233, %v1240
    %v1243 = vunpack.c.l.s4 1934713408
    %v1244 = vunpack.c.0.s8 %v1243
    %v1245 = vlaneseq
    %v1246 = vshrl.u32 %v1245, 7
    %v1247 = vsub.s32 %v1244, %v1246
    %v1248 = vrot.slane %v1234, %v1247
    %v1249 = vcombine.high %v1225, 0.0
    %v1250 = vcombine.high %v1232, 0.0
    %v1251 = vcombine.high %v1241, 0.0
    %v1252 = vcombine.high %v1248, 0.0
    %v1253 = vcombine.low %v1225, %v1232
    %v1255 = vunpack.c.l.s4 1983009808
    %v1256 = vunpack.c.0.s8 %v1255
    %v1257 = vlaneseq
    %v1258 = vshrl.u32 %v1257, 7
    %v1259 = vsub.s32 %v1256, %v1258
    %v1260 = vrot.slane %v1253, %v1259
    %v1261 = vcombine.low %v1249, %v1250
    %v1263 = vunpack.c.l.s4 1983009808
    %v1264 = vunpack.c.0.s8 %v1263
    %v1265 = vlaneseq
    %v1266 = vshrl.u32 %v1265, 7
    %v1267 = vsub.s32 %v1264, %v1266
    %v1268 = vrot.slane %v1261, %v1267
    %v1269 = vcombine.low %v1241, %v1248
    %v1271 = vunpack.c.l.s4 1983009808
    %v1272 = vunpack.c.0.s8 %v1271
    %v1273 = vlaneseq
    %v1274 = vshrl.u32 %v1273, 7
    %v1275 = vsub.s32 %v1272, %v1274
    %v1276 = vrot.slane %v1269, %v1275
    %v1277 = vcombine.low %v1251, %v1252
    %v1279 = vunpack.c.l.s4 1983009808
    %v1280 = vunpack.c.0.s8 %v1279
    %v1281 = vlaneseq
    %v1282 = vshrl.u32 %v1281, 7
    %v1283 = vsub.s32 %v1280, %v1282
    %v1284 = vrot.slane %v1277, %v1283
    %v1285 = vcombine.low %v1260, %v1268
    %v1286 = vcombine.high %v1260, %v1268
    %v1288 = vunpack.c.l.s4 1934713408
    %v1289 = vunpack.c.0.s8 %v1288
    %v1290 = vlaneseq
    %v1291 = vshrl.u32 %v1290, 7
    %v1292 = vsub.s32 %v1289, %v1291
    %v1293 = vrot.slane %v1285, %v1292
    %v1295 = vunpack.c.l.s4 1934713408
    %v1296 = vunpack.c.0.s8 %v1295
    %v1297 = vlaneseq
    %v1298 = vshrl.u32 %v1297, 7
    %v1299 = vsub.s32 %v1296, %v1298
    %v1300 = vrot.slane %v1286, %v1299
    %v1301 = vcombine.low %v1276, %v1284
    %v1302 = vcombine.high %v1276, %v1284
    %v1304 = vunpack.c.l.s4 1934713408
    %v1305 = vunpack.c.0.s8 %v1304
    %v1306 = vlaneseq
    %v1307 = vshrl.u32 %v1306, 7
    %v1308 = vsub.s32 %v1305, %v1307
    %v1309 = vrot.slane %v1301, %v1308
    %v1311 = vunpack.c.l.s4 1934713408
    %v1312 = vunpack.c.0.s8 %v1311
    %v1313 = vlaneseq
    %v1314 = vshrl.u32 %v1313, 7
    %v1315 = vsub.s32 %v1312, %v1314
    %v1316 = vrot.slane %v1302, %v1315
    %v1317 = vcombine.low %v1293, %v1309
    %v1318 = vcombine.high %v1293, %v1309
    %v1319 = vcombine.low %v1300, %v1316
    %v1320 = vcombine.high %v1300, %v1316
    %v1321 = vpack.c.bf16 %v1317, %v1317
    %v1322 = vpack.c.bf16 %v1318, %v1318
    %v1323 = vpack.c.bf16 %v1319, %v1319
    %v1324 = vpack.c.bf16 %v1320, %v1320
    %1325 = vrot.lane.b32.xlu0 %v105, 96
    %v1326 = vpop.permute.xlu0 %1325
    %1327 = vrot.lane.b32.xlu0 %v1177, 96
    %v1328 = vpop.permute.xlu0 %1327
    %1329 = vrot.lane.b32.xlu0 %v1180, 96
    %v1330 = vpop.permute.xlu0 %1329
    %1331 = vrot.lane.b32.xlu0 %v1183, 96
    %v1332 = vpop.permute.xlu0 %1331
    %v1337 = vcombine.low %v1326, %v1330
    %v1338 = vcombine.high %v1326, %v1330
    %v1340 = vunpack.c.l.s4 1983009808
    %v1341 = vunpack.c.0.s8 %v1340
    %v1342 = vlaneseq
    %v1343 = vshrl.u32 %v1342, 7
    %v1344 = vsub.s32 %v1341, %v1343
    %v1345 = vrot.slane %v1337, %v1344
    %v1347 = vunpack.c.l.s4 1983009808
    %v1348 = vunpack.c.0.s8 %v1347
    %v1349 = vlaneseq
    %v1350 = vshrl.u32 %v1349, 7
    %v1351 = vsub.s32 %v1348, %v1350
    %v1352 = vrot.slane %v1338, %v1351
    %v1353 = vcombine.low %v1328, %v1332
    %v1354 = vcombine.high %v1328, %v1332
    %v1356 = vunpack.c.l.s4 1983009808
    %v1357 = vunpack.c.0.s8 %v1356
    %v1358 = vlaneseq
    %v1359 = vshrl.u32 %v1358, 7
    %v1360 = vsub.s32 %v1357, %v1359
    %v1361 = vrot.slane %v1353, %v1360
    %v1363 = vunpack.c.l.s4 1983009808
    %v1364 = vunpack.c.0.s8 %v1363
    %v1365 = vlaneseq
    %v1366 = vshrl.u32 %v1365, 7
    %v1367 = vsub.s32 %v1364, %v1366
    %v1368 = vrot.slane %v1354, %v1367
    %v1369 = vcombine.low %v1345, %v1361
    %v1370 = vcombine.high %v1345, %v1361
    %v1372 = vunpack.c.l.s4 1934713408
    %v1373 = vunpack.c.0.s8 %v1372
    %v1374 = vlaneseq
    %v1375 = vshrl.u32 %v1374, 7
    %v1376 = vsub.s32 %v1373, %v1375
    %v1377 = vrot.slane %v1369, %v1376
    %v1379 = vunpack.c.l.s4 1934713408
    %v1380 = vunpack.c.0.s8 %v1379
    %v1381 = vlaneseq
    %v1382 = vshrl.u32 %v1381, 7
    %v1383 = vsub.s32 %v1380, %v1382
    %v1384 = vrot.slane %v1370, %v1383
    %v1385 = vcombine.low %v1352, %v1368
    %v1386 = vcombine.high %v1352, %v1368
    %v1388 = vunpack.c.l.s4 1934713408
    %v1389 = vunpack.c.0.s8 %v1388
    %v1390 = vlaneseq
    %v1391 = vshrl.u32 %v1390, 7
    %v1392 = vsub.s32 %v1389, %v1391
    %v1393 = vrot.slane %v1385, %v1392
    %v1395 = vunpack.c.l.s4 1934713408
    %v1396 = vunpack.c.0.s8 %v1395
    %v1397 = vlaneseq
    %v1398 = vshrl.u32 %v1397, 7
    %v1399 = vsub.s32 %v1396, %v1398
    %v1400 = vrot.slane %v1386, %v1399
    %v1401 = vcombine.high %v1377, 0.0
    %v1402 = vcombine.high %v1384, 0.0
    %v1403 = vcombine.high %v1393, 0.0
    %v1404 = vcombine.high %v1400, 0.0
    %v1405 = vcombine.low %v1377, %v1384
    %v1407 = vunpack.c.l.s4 1983009808
    %v1408 = vunpack.c.0.s8 %v1407
    %v1409 = vlaneseq
    %v1410 = vshrl.u32 %v1409, 7
    %v1411 = vsub.s32 %v1408, %v1410
    %v1412 = vrot.slane %v1405, %v1411
    %v1413 = vcombine.low %v1401, %v1402
    %v1415 = vunpack.c.l.s4 1983009808
    %v1416 = vunpack.c.0.s8 %v1415
    %v1417 = vlaneseq
    %v1418 = vshrl.u32 %v1417, 7
    %v1419 = vsub.s32 %v1416, %v1418
    %v1420 = vrot.slane %v1413, %v1419
    %v1421 = vcombine.low %v1393, %v1400
    %v1423 = vunpack.c.l.s4 1983009808
    %v1424 = vunpack.c.0.s8 %v1423
    %v1425 = vlaneseq
    %v1426 = vshrl.u32 %v1425, 7
    %v1427 = vsub.s32 %v1424, %v1426
    %v1428 = vrot.slane %v1421, %v1427
    %v1429 = vcombine.low %v1403, %v1404
    %v1431 = vunpack.c.l.s4 1983009808
    %v1432 = vunpack.c.0.s8 %v1431
    %v1433 = vlaneseq
    %v1434 = vshrl.u32 %v1433, 7
    %v1435 = vsub.s32 %v1432, %v1434
    %v1436 = vrot.slane %v1429, %v1435
    %v1437 = vcombine.low %v1412, %v1420
    %v1438 = vcombine.high %v1412, %v1420
    %v1440 = vunpack.c.l.s4 1934713408
    %v1441 = vunpack.c.0.s8 %v1440
    %v1442 = vlaneseq
    %v1443 = vshrl.u32 %v1442, 7
    %v1444 = vsub.s32 %v1441, %v1443
    %v1445 = vrot.slane %v1437, %v1444
    %v1447 = vunpack.c.l.s4 1934713408
    %v1448 = vunpack.c.0.s8 %v1447
    %v1449 = vlaneseq
    %v1450 = vshrl.u32 %v1449, 7
    %v1451 = vsub.s32 %v1448, %v1450
    %v1452 = vrot.slane %v1438, %v1451
    %v1453 = vcombine.low %v1428, %v1436
    %v1454 = vcombine.high %v1428, %v1436
    %v1456 = vunpack.c.l.s4 1934713408
    %v1457 = vunpack.c.0.s8 %v1456
    %v1458 = vlaneseq
    %v1459 = vshrl.u32 %v1458, 7
    %v1460 = vsub.s32 %v1457, %v1459
    %v1461 = vrot.slane %v1453, %v1460
    %v1463 = vunpack.c.l.s4 1934713408
    %v1464 = vunpack.c.0.s8 %v1463
    %v1465 = vlaneseq
    %v1466 = vshrl.u32 %v1465, 7
    %v1467 = vsub.s32 %v1464, %v1466
    %v1468 = vrot.slane %v1454, %v1467
    %v1469 = vcombine.low %v1445, %v1461
    %v1470 = vcombine.high %v1445, %v1461
    %v1471 = vcombine.low %v1452, %v1468
    %v1472 = vcombine.high %v1452, %v1468
    %v1473 = vpack.c.bf16 %v1469, %v1469
    %v1474 = vpack.c.bf16 %v1470, %v1470
    %v1475 = vpack.c.bf16 %v1471, %v1471
    %v1476 = vpack.c.bf16 %v1472, %v1472
    %1477 = vrot.lane.b32.xlu0 %v105, 64
    %v1478 = vpop.permute.xlu0 %1477
    %1479 = vrot.lane.b32.xlu0 %v1177, 64
    %v1480 = vpop.permute.xlu0 %1479
    %1481 = vrot.lane.b32.xlu0 %v1180, 64
    %v1482 = vpop.permute.xlu0 %1481
    %1483 = vrot.lane.b32.xlu0 %v1183, 64
    %v1484 = vpop.permute.xlu0 %1483
    %v1489 = vcombine.low %v1478, %v1482
    %v1490 = vcombine.high %v1478, %v1482
    %v1492 = vunpack.c.l.s4 1983009808
    %v1493 = vunpack.c.0.s8 %v1492
    %v1494 = vlaneseq
    %v1495 = vshrl.u32 %v1494, 7
    %v1496 = vsub.s32 %v1493, %v1495
    %v1497 = vrot.slane %v1489, %v1496
    %v1499 = vunpack.c.l.s4 1983009808
    %v1500 = vunpack.c.0.s8 %v1499
    %v1501 = vlaneseq
    %v1502 = vshrl.u32 %v1501, 7
    %v1503 = vsub.s32 %v1500, %v1502
    %v1504 = vrot.slane %v1490, %v1503
    %v1505 = vcombine.low %v1480, %v1484
    %v1506 = vcombine.high %v1480, %v1484
    %v1508 = vunpack.c.l.s4 1983009808
    %v1509 = vunpack.c.0.s8 %v1508
    %v1510 = vlaneseq
    %v1511 = vshrl.u32 %v1510, 7
    %v1512 = vsub.s32 %v1509, %v1511
    %v1513 = vrot.slane %v1505, %v1512
    %v1515 = vunpack.c.l.s4 1983009808
    %v1516 = vunpack.c.0.s8 %v1515
    %v1517 = vlaneseq
    %v1518 = vshrl.u32 %v1517, 7
    %v1519 = vsub.s32 %v1516, %v1518
    %v1520 = vrot.slane %v1506, %v1519
    %v1521 = vcombine.low %v1497, %v1513
    %v1522 = vcombine.high %v1497, %v1513
    %v1524 = vunpack.c.l.s4 1934713408
    %v1525 = vunpack.c.0.s8 %v1524
    %v1526 = vlaneseq
    %v1527 = vshrl.u32 %v1526, 7
    %v1528 = vsub.s32 %v1525, %v1527
    %v1529 = vrot.slane %v1521, %v1528
    %v1531 = vunpack.c.l.s4 1934713408
    %v1532 = vunpack.c.0.s8 %v1531
    %v1533 = vlaneseq
    %v1534 = vshrl.u32 %v1533, 7
    %v1535 = vsub.s32 %v1532, %v1534
    %v1536 = vrot.slane %v1522, %v1535
    %v1537 = vcombine.low %v1504, %v1520
    %v1538 = vcombine.high %v1504, %v1520
    %v1540 = vunpack.c.l.s4 1934713408
    %v1541 = vunpack.c.0.s8 %v1540
    %v1542 = vlaneseq
    %v1543 = vshrl.u32 %v1542, 7
    %v1544 = vsub.s32 %v1541, %v1543
    %v1545 = vrot.slane %v1537, %v1544
    %v1547 = vunpack.c.l.s4 1934713408
    %v1548 = vunpack.c.0.s8 %v1547
    %v1549 = vlaneseq
    %v1550 = vshrl.u32 %v1549, 7
    %v1551 = vsub.s32 %v1548, %v1550
    %v1552 = vrot.slane %v1538, %v1551
    %v1553 = vcombine.high %v1529, 0.0
    %v1554 = vcombine.high %v1536, 0.0
    %v1555 = vcombine.high %v1545, 0.0
    %v1556 = vcombine.high %v1552, 0.0
    %v1557 = vcombine.low %v1529, %v1536
    %v1559 = vunpack.c.l.s4 1983009808
    %v1560 = vunpack.c.0.s8 %v1559
    %v1561 = vlaneseq
    %v1562 = vshrl.u32 %v1561, 7
    %v1563 = vsub.s32 %v1560, %v1562
    %v1564 = vrot.slane %v1557, %v1563
    %v1565 = vcombine.low %v1553, %v1554
    %v1567 = vunpack.c.l.s4 1983009808
    %v1568 = vunpack.c.0.s8 %v1567
    %v1569 = vlaneseq
    %v1570 = vshrl.u32 %v1569, 7
    %v1571 = vsub.s32 %v1568, %v1570
    %v1572 = vrot.slane %v1565, %v1571
    %v1573 = vcombine.low %v1545, %v1552
    %v1575 = vunpack.c.l.s4 1983009808
    %v1576 = vunpack.c.0.s8 %v1575
    %v1577 = vlaneseq
    %v1578 = vshrl.u32 %v1577, 7
    %v1579 = vsub.s32 %v1576, %v1578
    %v1580 = vrot.slane %v1573, %v1579
    %v1581 = vcombine.low %v1555, %v1556
    %v1583 = vunpack.c.l.s4 1983009808
    %v1584 = vunpack.c.0.s8 %v1583
    %v1585 = vlaneseq
    %v1586 = vshrl.u32 %v1585, 7
    %v1587 = vsub.s32 %v1584, %v1586
    %v1588 = vrot.slane %v1581, %v1587
    %v1589 = vcombine.low %v1564, %v1572
    %v1590 = vcombine.high %v1564, %v1572
    %v1592 = vunpack.c.l.s4 1934713408
    %v1593 = vunpack.c.0.s8 %v1592
    %v1594 = vlaneseq
    %v1595 = vshrl.u32 %v1594, 7
    %v1596 = vsub.s32 %v1593, %v1595
    %v1597 = vrot.slane %v1589, %v1596
    %v1599 = vunpack.c.l.s4 1934713408
    %v1600 = vunpack.c.0.s8 %v1599
    %v1601 = vlaneseq
    %v1602 = vshrl.u32 %v1601, 7
    %v1603 = vsub.s32 %v1600, %v1602
    %v1604 = vrot.slane %v1590, %v1603
    %v1605 = vcombine.low %v1580, %v1588
    %v1606 = vcombine.high %v1580, %v1588
    %v1608 = vunpack.c.l.s4 1934713408
    %v1609 = vunpack.c.0.s8 %v1608
    %v1610 = vlaneseq
    %v1611 = vshrl.u32 %v1610, 7
    %v1612 = vsub.s32 %v1609, %v1611
    %v1613 = vrot.slane %v1605, %v1612
    %v1615 = vunpack.c.l.s4 1934713408
    %v1616 = vunpack.c.0.s8 %v1615
    %v1617 = vlaneseq
    %v1618 = vshrl.u32 %v1617, 7
    %v1619 = vsub.s32 %v1616, %v1618
    %v1620 = vrot.slane %v1606, %v1619
    %v1621 = vcombine.low %v1597, %v1613
    %v1622 = vcombine.high %v1597, %v1613
    %v1623 = vcombine.low %v1604, %v1620
    %v1624 = vcombine.high %v1604, %v1620
    %v1625 = vpack.c.bf16 %v1621, %v1621
    %v1626 = vpack.c.bf16 %v1622, %v1622
    %v1627 = vpack.c.bf16 %v1623, %v1623
    %v1628 = vpack.c.bf16 %v1624, %v1624
    %v1630 = vsel %vm562, %v1321, 0
    %v1633 = vsel %vm562, %v1473, 0
    %1635 = vmatprep.subr.bf16.mxu0 0
    %1636 = vmatpush1.bf16.xpose.msra.mxu0 %v1633
    %1637 = vmatprep.subr.bf16.mxu0 0
    %1638 = vmatpush1.bf16.xpose.msra.mxu0 0
    %1639 = vmatprep.subr.bf16.mxu0 0
    %1640 = vmatpush1.bf16.xpose.msra.mxu0 0
    %1641 = vmatprep.subr.bf16.mxu0 0
    %1642 = vmatpush1.bf16.xpose.msra.mxu0 0
    %1643 = vmatprep.subr.bf16.mxu0 0
    %1644 = vmatpush1.bf16.xpose.msra.mxu0 0
    %1645 = vmatprep.subr.bf16.mxu0 0
    %1646 = vmatpush1.bf16.xpose.msra.mxu0 0
    %1647 = vmatprep.subr.bf16.mxu0 0
    %1648 = vmatpush1.bf16.xpose.msra.mxu0 0
    %1649 = vmatprep.subr.bf16.mxu0 0
    %1650 = vmatpush1.bf16.xpose.msra.mxu0 0
    %1651 = vmatprep.subr.bf16.mxu0 0
    %1652 = vmatpush1.bf16.xpose.msra.mxu0 0
    %1653 = vmatprep.subr.bf16.mxu0 0
    %1654 = vmatpush1.bf16.xpose.msra.mxu0 0
    %1655 = vmatprep.subr.bf16.mxu0 0
    %1656 = vmatpush1.bf16.xpose.msra.mxu0 0
    %1657 = vmatprep.subr.bf16.mxu0 0
    %1658 = vmatpush1.bf16.xpose.msra.mxu0 0
    %1659 = vmatprep.subr.bf16.mxu0 0
    %1660 = vmatpush1.bf16.xpose.msra.mxu0 0
    %1661 = vmatprep.subr.bf16.mxu0 0
    %1662 = vmatpush1.bf16.xpose.msra.mxu0 0
    %1663 = vmatprep.subr.bf16.mxu0 0
    %1664 = vmatpush1.bf16.xpose.msra.mxu0 0
    %1665 = vmatprep.subr.bf16.mxu0 0
    %1666 = vmatpush1.bf16.xpose.msra.mxu0 0
    %1667 = vmatprep.mubr.bf16.mxu0 0
    %1668 = vmatmul.mubr.bf16.gmra.mrb[0].mxu0 %v1630
    %v1669 = vpop.f32.mrb[0].mxu0
    %v1670 = vadd.f32 0.0, %v1669
    %v1671 = vpop.f32.mrb[0].mxu0
    %v1672 = vpop.f32.mrb[0].mxu0
    %v1673 = vpop.f32.mrb[0].mxu0
    %1674 = vdwg.mxu0
    %v1676 = vsel %vm562, %v1322, 0
    %v1679 = vsel %vm562, %v1474, 0
    %1681 = vmatprep.subr.bf16.mxu0 0
    %1682 = vmatpush1.bf16.xpose.msra.mxu0 %v1679
    %1683 = vmatprep.subr.bf16.mxu0 0
    %1684 = vmatpush1.bf16.xpose.msra.mxu0 0
    %1685 = vmatprep.subr.bf16.mxu0 0
    %1686 = vmatpush1.bf16.xpose.msra.mxu0 0
    %1687 = vmatprep.subr.bf16.mxu0 0
    %1688 = vmatpush1.bf16.xpose.msra.mxu0 0
    %1689 = vmatprep.subr.bf16.mxu0 0
    %1690 = vmatpush1.bf16.xpose.msra.mxu0 0
    %1691 = vmatprep.subr.bf16.mxu0 0
    %1692 = vmatpush1.bf16.xpose.msra.mxu0 0
    %1693 = vmatprep.subr.bf16.mxu0 0
    %1694 = vmatpush1.bf16.xpose.msra.mxu0 0
    %1695 = vmatprep.subr.bf16.mxu0 0
    %1696 = vmatpush1.bf16.xpose.msra.mxu0 0
    %1697 = vmatprep.subr.bf16.mxu0 0
    %1698 = vmatpush1.bf16.xpose.msra.mxu0 0
    %1699 = vmatprep.subr.bf16.mxu0 0
    %1700 = vmatpush1.bf16.xpose.msra.mxu0 0
    %1701 = vmatprep.subr.bf16.mxu0 0
    %1702 = vmatpush1.bf16.xpose.msra.mxu0 0
    %1703 = vmatprep.subr.bf16.mxu0 0
    %1704 = vmatpush1.bf16.xpose.msra.mxu0 0
    %1705 = vmatprep.subr.bf16.mxu0 0
    %1706 = vmatpush1.bf16.xpose.msra.mxu0 0
    %1707 = vmatprep.subr.bf16.mxu0 0
    %1708 = vmatpush1.bf16.xpose.msra.mxu0 0
    %1709 = vmatprep.subr.bf16.mxu0 0
    %1710 = vmatpush1.bf16.xpose.msra.mxu0 0
    %1711 = vmatprep.subr.bf16.mxu0 0
    %1712 = vmatpush1.bf16.xpose.msra.mxu0 0
    %1713 = vmatprep.mubr.bf16.mxu0 0
    %1714 = vmatmul.mubr.bf16.gmra.mrb[0].mxu0 %v1676
    %v1715 = vpop.f32.mrb[0].mxu0
    %v1716 = vadd.f32 0.0, %v1715
    %v1717 = vpop.f32.mrb[0].mxu0
    %v1718 = vpop.f32.mrb[0].mxu0
    %v1719 = vpop.f32.mrb[0].mxu0
    %1720 = vdwg.mxu0
    %v1722 = vsel %vm562, %v1323, 0
    %v1725 = vsel %vm562, %v1475, 0
    %1727 = vmatprep.subr.bf16.mxu0 0
    %1728 = vmatpush1.bf16.xpose.msra.mxu0 %v1725
    %1729 = vmatprep.subr.bf16.mxu0 0
    %1730 = vmatpush1.bf16.xpose.msra.mxu0 0
    %1731 = vmatprep.subr.bf16.mxu0 0
    %1732 = vmatpush1.bf16.xpose.msra.mxu0 0
    %1733 = vmatprep.subr.bf16.mxu0 0
    %1734 = vmatpush1.bf16.xpose.msra.mxu0 0
    %1735 = vmatprep.subr.bf16.mxu0 0
    %1736 = vmatpush1.bf16.xpose.msra.mxu0 0
    %1737 = vmatprep.subr.bf16.mxu0 0
    %1738 = vmatpush1.bf16.xpose.msra.mxu0 0
    %1739 = vmatprep.subr.bf16.mxu0 0
    %1740 = vmatpush1.bf16.xpose.msra.mxu0 0
    %1741 = vmatprep.subr.bf16.mxu0 0
    %1742 = vmatpush1.bf16.xpose.msra.mxu0 0
    %1743 = vmatprep.subr.bf16.mxu0 0
    %1744 = vmatpush1.bf16.xpose.msra.mxu0 0
    %1745 = vmatprep.subr.bf16.mxu0 0
    %1746 = vmatpush1.bf16.xpose.msra.mxu0 0
    %1747 = vmatprep.subr.bf16.mxu0 0
    %1748 = vmatpush1.bf16.xpose.msra.mxu0 0
    %1749 = vmatprep.subr.bf16.mxu0 0
    %1750 = vmatpush1.bf16.xpose.msra.mxu0 0
    %1751 = vmatprep.subr.bf16.mxu0 0
    %1752 = vmatpush1.bf16.xpose.msra.mxu0 0
    %1753 = vmatprep.subr.bf16.mxu0 0
    %1754 = vmatpush1.bf16.xpose.msra.mxu0 0
    %1755 = vmatprep.subr.bf16.mxu0 0
    %1756 = vmatpush1.bf16.xpose.msra.mxu0 0
    %1757 = vmatprep.subr.bf16.mxu0 0
    %1758 = vmatpush1.bf16.xpose.msra.mxu0 0
    %1759 = vmatprep.mubr.bf16.mxu0 0
    %1760 = vmatmul.mubr.bf16.gmra.mrb[0].mxu0 %v1722
    %v1761 = vpop.f32.mrb[0].mxu0
    %v1762 = vadd.f32 0.0, %v1761
    %v1763 = vpop.f32.mrb[0].mxu0
    %v1764 = vpop.f32.mrb[0].mxu0
    %v1765 = vpop.f32.mrb[0].mxu0
    %1766 = vdwg.mxu0
    %v1768 = vsel %vm562, %v1324, 0
    %v1771 = vsel %vm562, %v1476, 0
    %1773 = vmatprep.subr.bf16.mxu0 0
    %1774 = vmatpush1.bf16.xpose.msra.mxu0 %v1771
    %1775 = vmatprep.subr.bf16.mxu0 0
    %1776 = vmatpush1.bf16.xpose.msra.mxu0 0
    %1777 = vmatprep.subr.bf16.mxu0 0
    %1778 = vmatpush1.bf16.xpose.msra.mxu0 0
    %1779 = vmatprep.subr.bf16.mxu0 0
    %1780 = vmatpush1.bf16.xpose.msra.mxu0 0
    %1781 = vmatprep.subr.bf16.mxu0 0
    %1782 = vmatpush1.bf16.xpose.msra.mxu0 0
    %1783 = vmatprep.subr.bf16.mxu0 0
    %1784 = vmatpush1.bf16.xpose.msra.mxu0 0
    %1785 = vmatprep.subr.bf16.mxu0 0
    %1786 = vmatpush1.bf16.xpose.msra.mxu0 0
    %1787 = vmatprep.subr.bf16.mxu0 0
    %1788 = vmatpush1.bf16.xpose.msra.mxu0 0
    %1789 = vmatprep.subr.bf16.mxu0 0
    %1790 = vmatpush1.bf16.xpose.msra.mxu0 0
    %1791 = vmatprep.subr.bf16.mxu0 0
    %1792 = vmatpush1.bf16.xpose.msra.mxu0 0
    %1793 = vmatprep.subr.bf16.mxu0 0
    %1794 = vmatpush1.bf16.xpose.msra.mxu0 0
    %1795 = vmatprep.subr.bf16.mxu0 0
    %1796 = vmatpush1.bf16.xpose.msra.mxu0 0
    %1797 = vmatprep.subr.bf16.mxu0 0
    %1798 = vmatpush1.bf16.xpose.msra.mxu0 0
    %1799 = vmatprep.subr.bf16.mxu0 0
    %1800 = vmatpush1.bf16.xpose.msra.mxu0 0
    %1801 = vmatprep.subr.bf16.mxu0 0
    %1802 = vmatpush1.bf16.xpose.msra.mxu0 0
    %1803 = vmatprep.subr.bf16.mxu0 0
    %1804 = vmatpush1.bf16.xpose.msra.mxu0 0
    %1805 = vmatprep.mubr.bf16.mxu0 0
    %1806 = vmatmul.mubr.bf16.gmra.mrb[0].mxu0 %v1768
    %v1807 = vpop.f32.mrb[0].mxu0
    %v1808 = vadd.f32 0.0, %v1807
    %v1809 = vpop.f32.mrb[0].mxu0
    %v1810 = vpop.f32.mrb[0].mxu0
    %v1811 = vpop.f32.mrb[0].mxu0
    %1812 = vdwg.mxu0
    %v1813 = vsel %vm562, %v1670, -inf
    %1814 = vmax.xlane.f32.xlu0 %v1813
    %v1815 = vpop.xlane.xlu0 %1814
    %v1816 = vsel %vm562, %v1716, -inf
    %1817 = vmax.xlane.f32.xlu0 %v1816
    %v1818 = vpop.xlane.xlu0 %1817
    %v1819 = vsel %vm562, %v1762, -inf
    %1820 = vmax.xlane.f32.xlu0 %v1819
    %v1821 = vpop.xlane.xlu0 %1820
    %v1822 = vsel %vm562, %v1808, -inf
    %1823 = vmax.xlane.f32.xlu0 %v1822
    %v1824 = vpop.xlane.xlu0 %1823
    %v1825 = vsub.f32 %v1670, %v1815
    %v1826 = vsub.f32 %v1716, %v1818
    %v1827 = vsub.f32 %v1762, %v1821
    %v1828 = vsub.f32 %v1808, %v1824
    %v1829 = vmul.f32 %v1825, 1.442695
    %v1830 = vpow.pop %v1829
    %v1831 = vmul.f32 %v1826, 1.442695
    %v1832 = vpow.pop %v1831
    %v1833 = vmul.f32 %v1827, 1.442695
    %v1834 = vpow.pop %v1833
    %v1835 = vmul.f32 %v1828, 1.442695
    %v1836 = vpow.pop %v1835
    %v1837 = vsel %vm562, %v1830, 0.0
    %1838 = vadd.xlane.f32.xlu0 %v1837
    %v1839 = vpop.xlane.xlu0 %1838
    %v1840 = vsel %vm562, %v1832, 0.0
    %1841 = vadd.xlane.f32.xlu0 %v1840
    %v1842 = vpop.xlane.xlu0 %1841
    %v1843 = vsel %vm562, %v1834, 0.0
    %1844 = vadd.xlane.f32.xlu0 %v1843
    %v1845 = vpop.xlane.xlu0 %1844
    %v1846 = vsel %vm562, %v1836, 0.0
    %1847 = vadd.xlane.f32.xlu0 %v1846
    %v1848 = vpop.xlane.xlu0 %1847
    %v1849 = vrcp.pop %v1839
    %v1850 = vrcp.pop %v1842
    %v1851 = vrcp.pop %v1845
    %v1852 = vrcp.pop %v1848
    %v1853 = vmul.f32 %v1830, %v1849
    %v1854 = vmul.f32 %v1832, %v1850
    %v1855 = vmul.f32 %v1834, %v1851
    %v1856 = vmul.f32 %v1836, %v1852
    %v1857 = vpack.c.bf16 %v1853, %v1853
    %v1858 = vpack.c.bf16 %v1854, %v1854
    %v1859 = vpack.c.bf16 %v1855, %v1855
    %v1860 = vpack.c.bf16 %v1856, %v1856
    %v1862 = vsel %vm562, %v1857, 0
    %v1865 = vsel %vm798, %v1625, 0
    %1867 = vmatprep.subr.bf16.mxu0 0
    %1868 = vmatpush1.bf16.msra.mxu0 %v1865
    %1869 = vmatprep.subr.bf16.mxu0 0
    %1870 = vmatpush1.bf16.msra.mxu0 0
    %1871 = vmatprep.subr.bf16.mxu0 0
    %1872 = vmatpush1.bf16.msra.mxu0 0
    %1873 = vmatprep.subr.bf16.mxu0 0
    %1874 = vmatpush1.bf16.msra.mxu0 0
    %1875 = vmatprep.subr.bf16.mxu0 0
    %1876 = vmatpush1.bf16.msra.mxu0 0
    %1877 = vmatprep.subr.bf16.mxu0 0
    %1878 = vmatpush1.bf16.msra.mxu0 0
    %1879 = vmatprep.subr.bf16.mxu0 0
    %1880 = vmatpush1.bf16.msra.mxu0 0
    %1881 = vmatprep.subr.bf16.mxu0 0
    %1882 = vmatpush1.bf16.msra.mxu0 0
    %1883 = vmatprep.subr.bf16.mxu0 0
    %1884 = vmatpush1.bf16.msra.mxu0 0
    %1885 = vmatprep.subr.bf16.mxu0 0
    %1886 = vmatpush1.bf16.msra.mxu0 0
    %1887 = vmatprep.subr.bf16.mxu0 0
    %1888 = vmatpush1.bf16.msra.mxu0 0
    %1889 = vmatprep.subr.bf16.mxu0 0
    %1890 = vmatpush1.bf16.msra.mxu0 0
    %1891 = vmatprep.subr.bf16.mxu0 0
    %1892 = vmatpush1.bf16.msra.mxu0 0
    %1893 = vmatprep.subr.bf16.mxu0 0
    %1894 = vmatpush1.bf16.msra.mxu0 0
    %1895 = vmatprep.subr.bf16.mxu0 0
    %1896 = vmatpush1.bf16.msra.mxu0 0
    %1897 = vmatprep.subr.bf16.mxu0 0
    %1898 = vmatpush1.bf16.msra.mxu0 0
    %1899 = vmatprep.mubr.bf16.mxu0 0
    %1900 = vmatmul.mubr.bf16.gmra.mrb[0].mxu0 %v1862
    %v1901 = vpop.f32.mrb[0].mxu0
    %v1902 = vadd.f32 0.0, %v1901
    %v1903 = vpop.f32.mrb[0].mxu0
    %v1904 = vpop.f32.mrb[0].mxu0
    %v1905 = vpop.f32.mrb[0].mxu0
    %1906 = vdwg.mxu0
    %v1908 = vsel %vm562, %v1858, 0
    %v1911 = vsel %vm798, %v1626, 0
    %1913 = vmatprep.subr.bf16.mxu0 0
    %1914 = vmatpush1.bf16.msra.mxu0 %v1911
    %1915 = vmatprep.subr.bf16.mxu0 0
    %1916 = vmatpush1.bf16.msra.mxu0 0
    %1917 = vmatprep.subr.bf16.mxu0 0
    %1918 = vmatpush1.bf16.msra.mxu0 0
    %1919 = vmatprep.subr.bf16.mxu0 0
    %1920 = vmatpush1.bf16.msra.mxu0 0
    %1921 = vmatprep.subr.bf16.mxu0 0
    %1922 = vmatpush1.bf16.msra.mxu0 0
    %1923 = vmatprep.subr.bf16.mxu0 0
    %1924 = vmatpush1.bf16.msra.mxu0 0
    %1925 = vmatprep.subr.bf16.mxu0 0
    %1926 = vmatpush1.bf16.msra.mxu0 0
    %1927 = vmatprep.subr.bf16.mxu0 0
    %1928 = vmatpush1.bf16.msra.mxu0 0
    %1929 = vmatprep.subr.bf16.mxu0 0
    %1930 = vmatpush1.bf16.msra.mxu0 0
    %1931 = vmatprep.subr.bf16.mxu0 0
    %1932 = vmatpush1.bf16.msra.mxu0 0
    %1933 = vmatprep.subr.bf16.mxu0 0
    %1934 = vmatpush1.bf16.msra.mxu0 0
    %1935 = vmatprep.subr.bf16.mxu0 0
    %1936 = vmatpush1.bf16.msra.mxu0 0
    %1937 = vmatprep.subr.bf16.mxu0 0
    %1938 = vmatpush1.bf16.msra.mxu0 0
    %1939 = vmatprep.subr.bf16.mxu0 0
    %1940 = vmatpush1.bf16.msra.mxu0 0
    %1941 = vmatprep.subr.bf16.mxu0 0
    %1942 = vmatpush1.bf16.msra.mxu0 0
    %1943 = vmatprep.subr.bf16.mxu0 0
    %1944 = vmatpush1.bf16.msra.mxu0 0
    %1945 = vmatprep.mubr.bf16.mxu0 0
    %1946 = vmatmul.mubr.bf16.gmra.mrb[0].mxu0 %v1908
    %v1947 = vpop.f32.mrb[0].mxu0
    %v1948 = vadd.f32 0.0, %v1947
    %v1949 = vpop.f32.mrb[0].mxu0
    %v1950 = vpop.f32.mrb[0].mxu0
    %v1951 = vpop.f32.mrb[0].mxu0
    %1952 = vdwg.mxu0
    %v1954 = vsel %vm562, %v1859, 0
    %v1957 = vsel %vm798, %v1627, 0
    %1959 = vmatprep.subr.bf16.mxu0 0
    %1960 = vmatpush1.bf16.msra.mxu0 %v1957
    %1961 = vmatprep.subr.bf16.mxu0 0
    %1962 = vmatpush1.bf16.msra.mxu0 0
    %1963 = vmatprep.subr.bf16.mxu0 0
    %1964 = vmatpush1.bf16.msra.mxu0 0
    %1965 = vmatprep.subr.bf16.mxu0 0
    %1966 = vmatpush1.bf16.msra.mxu0 0
    %1967 = vmatprep.subr.bf16.mxu0 0
    %1968 = vmatpush1.bf16.msra.mxu0 0
    %1969 = vmatprep.subr.bf16.mxu0 0
    %1970 = vmatpush1.bf16.msra.mxu0 0
    %1971 = vmatprep.subr.bf16.mxu0 0
    %1972 = vmatpush1.bf16.msra.mxu0 0
    %1973 = vmatprep.subr.bf16.mxu0 0
    %1974 = vmatpush1.bf16.msra.mxu0 0
    %1975 = vmatprep.subr.bf16.mxu0 0
    %1976 = vmatpush1.bf16.msra.mxu0 0
    %1977 = vmatprep.subr.bf16.mxu0 0
    %1978 = vmatpush1.bf16.msra.mxu0 0
    %1979 = vmatprep.subr.bf16.mxu0 0
    %1980 = vmatpush1.bf16.msra.mxu0 0
    %1981 = vmatprep.subr.bf16.mxu0 0
    %1982 = vmatpush1.bf16.msra.mxu0 0
    %1983 = vmatprep.subr.bf16.mxu0 0
    %1984 = vmatpush1.bf16.msra.mxu0 0
    %1985 = vmatprep.subr.bf16.mxu0 0
    %1986 = vmatpush1.bf16.msra.mxu0 0
    %1987 = vmatprep.subr.bf16.mxu0 0
    %1988 = vmatpush1.bf16.msra.mxu0 0
    %1989 = vmatprep.subr.bf16.mxu0 0
    %1990 = vmatpush1.bf16.msra.mxu0 0
    %1991 = vmatprep.mubr.bf16.mxu0 0
    %1992 = vmatmul.mubr.bf16.gmra.mrb[0].mxu0 %v1954
    %v1993 = vpop.f32.mrb[0].mxu0
    %v1994 = vadd.f32 0.0, %v1993
    %v1995 = vpop.f32.mrb[0].mxu0
    %v1996 = vpop.f32.mrb[0].mxu0
    %v1997 = vpop.f32.mrb[0].mxu0
    %1998 = vdwg.mxu0
    %v2000 = vsel %vm562, %v1860, 0
    %v2003 = vsel %vm798, %v1628, 0
    %2005 = vmatprep.subr.bf16.mxu0 0
    %2006 = vmatpush1.bf16.msra.mxu0 %v2003
    %2007 = vmatprep.subr.bf16.mxu0 0
    %2008 = vmatpush1.bf16.msra.mxu0 0
    %2009 = vmatprep.subr.bf16.mxu0 0
    %2010 = vmatpush1.bf16.msra.mxu0 0
    %2011 = vmatprep.subr.bf16.mxu0 0
    %2012 = vmatpush1.bf16.msra.mxu0 0
    %2013 = vmatprep.subr.bf16.mxu0 0
    %2014 = vmatpush1.bf16.msra.mxu0 0
    %2015 = vmatprep.subr.bf16.mxu0 0
    %2016 = vmatpush1.bf16.msra.mxu0 0
    %2017 = vmatprep.subr.bf16.mxu0 0
    %2018 = vmatpush1.bf16.msra.mxu0 0
    %2019 = vmatprep.subr.bf16.mxu0 0
    %2020 = vmatpush1.bf16.msra.mxu0 0
    %2021 = vmatprep.subr.bf16.mxu0 0
    %2022 = vmatpush1.bf16.msra.mxu0 0
    %2023 = vmatprep.subr.bf16.mxu0 0
    %2024 = vmatpush1.bf16.msra.mxu0 0
    %2025 = vmatprep.subr.bf16.mxu0 0
    %2026 = vmatpush1.bf16.msra.mxu0 0
    %2027 = vmatprep.subr.bf16.mxu0 0
    %2028 = vmatpush1.bf16.msra.mxu0 0
    %2029 = vmatprep.subr.bf16.mxu0 0
    %2030 = vmatpush1.bf16.msra.mxu0 0
    %2031 = vmatprep.subr.bf16.mxu0 0
    %2032 = vmatpush1.bf16.msra.mxu0 0
    %2033 = vmatprep.subr.bf16.mxu0 0
    %2034 = vmatpush1.bf16.msra.mxu0 0
    %2035 = vmatprep.subr.bf16.mxu0 0
    %2036 = vmatpush1.bf16.msra.mxu0 0
    %2037 = vmatprep.mubr.bf16.mxu0 0
    %2038 = vmatmul.mubr.bf16.gmra.mrb[0].mxu0 %v2000
    %v2039 = vpop.f32.mrb[0].mxu0
    %v2040 = vadd.f32 0.0, %v2039
    %v2041 = vpop.f32.mrb[0].mxu0
    %v2042 = vpop.f32.mrb[0].mxu0
    %v2043 = vpop.f32.mrb[0].mxu0
    %2044 = vdwg.mxu0
    %v2045 = vpack.c.bf16 %v1902, %v1902
    %v2046 = vpack.c.bf16 %v1948, %v1948
    %v2047 = vpack.c.bf16 %v1994, %v1994
    %v2048 = vpack.c.bf16 %v2040, %v2040
    %v2050 = vsel %vm562, %v2045, 0
    %2052 = vmatprep.subr.bf16.mxu0 0
    %2053 = vmatpush1.bf16.msra.mxu0 %v988
    %2054 = vmatprep.subr.bf16.mxu0 0
    %2055 = vmatpush1.bf16.msra.mxu0 0
    %2056 = vmatprep.subr.bf16.mxu0 0
    %2057 = vmatpush1.bf16.msra.mxu0 0
    %2058 = vmatprep.subr.bf16.mxu0 0
    %2059 = vmatpush1.bf16.msra.mxu0 0
    %2060 = vmatprep.subr.bf16.mxu0 0
    %2061 = vmatpush1.bf16.msra.mxu0 0
    %2062 = vmatprep.subr.bf16.mxu0 0
    %2063 = vmatpush1.bf16.msra.mxu0 0
    %2064 = vmatprep.subr.bf16.mxu0 0
    %2065 = vmatpush1.bf16.msra.mxu0 0
    %2066 = vmatprep.subr.bf16.mxu0 0
    %2067 = vmatpush1.bf16.msra.mxu0 0
    %2068 = vmatprep.subr.bf16.mxu0 0
    %2069 = vmatpush1.bf16.msra.mxu0 0
    %2070 = vmatprep.subr.bf16.mxu0 0
    %2071 = vmatpush1.bf16.msra.mxu0 0
    %2072 = vmatprep.subr.bf16.mxu0 0
    %2073 = vmatpush1.bf16.msra.mxu0 0
    %2074 = vmatprep.subr.bf16.mxu0 0
    %2075 = vmatpush1.bf16.msra.mxu0 0
    %2076 = vmatprep.subr.bf16.mxu0 0
    %2077 = vmatpush1.bf16.msra.mxu0 0
    %2078 = vmatprep.subr.bf16.mxu0 0
    %2079 = vmatpush1.bf16.msra.mxu0 0
    %2080 = vmatprep.subr.bf16.mxu0 0
    %2081 = vmatpush1.bf16.msra.mxu0 0
    %2082 = vmatprep.subr.bf16.mxu0 0
    %2083 = vmatpush1.bf16.msra.mxu0 0
    %2084 = vmatprep.mubr.bf16.mxu0 0
    %2085 = vmatmul.mubr.bf16.gmra.mrb[0].mxu0 %v2050
    %v2086 = vpop.f32.mrb[0].mxu0
    %v2087 = vadd.f32 0.0, %v2086
    %v2088 = vpop.f32.mrb[0].mxu0
    %v2089 = vpop.f32.mrb[0].mxu0
    %v2090 = vpop.f32.mrb[0].mxu0
    %2091 = vdwg.mxu0
    %v2093 = vsel %vm562, %v2046, 0
    %2095 = vmatprep.subr.bf16.mxu0 0
    %2096 = vmatpush1.bf16.msra.mxu0 %v1034
    %2097 = vmatprep.subr.bf16.mxu0 0
    %2098 = vmatpush1.bf16.msra.mxu0 0
    %2099 = vmatprep.subr.bf16.mxu0 0
    %2100 = vmatpush1.bf16.msra.mxu0 0
    %2101 = vmatprep.subr.bf16.mxu0 0
    %2102 = vmatpush1.bf16.msra.mxu0 0
    %2103 = vmatprep.subr.bf16.mxu0 0
    %2104 = vmatpush1.bf16.msra.mxu0 0
    %2105 = vmatprep.subr.bf16.mxu0 0
    %2106 = vmatpush1.bf16.msra.mxu0 0
    %2107 = vmatprep.subr.bf16.mxu0 0
    %2108 = vmatpush1.bf16.msra.mxu0 0
    %2109 = vmatprep.subr.bf16.mxu0 0
    %2110 = vmatpush1.bf16.msra.mxu0 0
    %2111 = vmatprep.subr.bf16.mxu0 0
    %2112 = vmatpush1.bf16.msra.mxu0 0
    %2113 = vmatprep.subr.bf16.mxu0 0
    %2114 = vmatpush1.bf16.msra.mxu0 0
    %2115 = vmatprep.subr.bf16.mxu0 0
    %2116 = vmatpush1.bf16.msra.mxu0 0
    %2117 = vmatprep.subr.bf16.mxu0 0
    %2118 = vmatpush1.bf16.msra.mxu0 0
    %2119 = vmatprep.subr.bf16.mxu0 0
    %2120 = vmatpush1.bf16.msra.mxu0 0
    %2121 = vmatprep.subr.bf16.mxu0 0
    %2122 = vmatpush1.bf16.msra.mxu0 0
    %2123 = vmatprep.subr.bf16.mxu0 0
    %2124 = vmatpush1.bf16.msra.mxu0 0
    %2125 = vmatprep.subr.bf16.mxu0 0
    %2126 = vmatpush1.bf16.msra.mxu0 0
    %2127 = vmatprep.mubr.bf16.mxu0 0
    %2128 = vmatmul.mubr.bf16.gmra.mrb[0].mxu0 %v2093
    %v2129 = vpop.f32.mrb[0].mxu0
    %v2130 = vadd.f32 0.0, %v2129
    %v2131 = vpop.f32.mrb[0].mxu0
    %v2132 = vpop.f32.mrb[0].mxu0
    %v2133 = vpop.f32.mrb[0].mxu0
    %2134 = vdwg.mxu0
    %v2136 = vsel %vm562, %v2047, 0
    %2138 = vmatprep.subr.bf16.mxu0 0
    %2139 = vmatpush1.bf16.msra.mxu0 %v1080
    %2140 = vmatprep.subr.bf16.mxu0 0
    %2141 = vmatpush1.bf16.msra.mxu0 0
    %2142 = vmatprep.subr.bf16.mxu0 0
    %2143 = vmatpush1.bf16.msra.mxu0 0
    %2144 = vmatprep.subr.bf16.mxu0 0
    %2145 = vmatpush1.bf16.msra.mxu0 0
    %2146 = vmatprep.subr.bf16.mxu0 0
    %2147 = vmatpush1.bf16.msra.mxu0 0
    %2148 = vmatprep.subr.bf16.mxu0 0
    %2149 = vmatpush1.bf16.msra.mxu0 0
    %2150 = vmatprep.subr.bf16.mxu0 0
    %2151 = vmatpush1.bf16.msra.mxu0 0
    %2152 = vmatprep.subr.bf16.mxu0 0
    %2153 = vmatpush1.bf16.msra.mxu0 0
    %2154 = vmatprep.subr.bf16.mxu0 0
    %2155 = vmatpush1.bf16.msra.mxu0 0
    %2156 = vmatprep.subr.bf16.mxu0 0
    %2157 = vmatpush1.bf16.msra.mxu0 0
    %2158 = vmatprep.subr.bf16.mxu0 0
    %2159 = vmatpush1.bf16.msra.mxu0 0
    %2160 = vmatprep.subr.bf16.mxu0 0
    %2161 = vmatpush1.bf16.msra.mxu0 0
    %2162 = vmatprep.subr.bf16.mxu0 0
    %2163 = vmatpush1.bf16.msra.mxu0 0
    %2164 = vmatprep.subr.bf16.mxu0 0
    %2165 = vmatpush1.bf16.msra.mxu0 0
    %2166 = vmatprep.subr.bf16.mxu0 0
    %2167 = vmatpush1.bf16.msra.mxu0 0
    %2168 = vmatprep.subr.bf16.mxu0 0
    %2169 = vmatpush1.bf16.msra.mxu0 0
    %2170 = vmatprep.mubr.bf16.mxu0 0
    %2171 = vmatmul.mubr.bf16.gmra.mrb[0].mxu0 %v2136
    %v2172 = vpop.f32.mrb[0].mxu0
    %v2173 = vadd.f32 0.0, %v2172
    %v2174 = vpop.f32.mrb[0].mxu0
    %v2175 = vpop.f32.mrb[0].mxu0
    %v2176 = vpop.f32.mrb[0].mxu0
    %2177 = vdwg.mxu0
    %v2179 = vsel %vm562, %v2048, 0
    %2181 = vmatprep.subr.bf16.mxu0 0
    %2182 = vmatpush1.bf16.msra.mxu0 %v1126
    %2183 = vmatprep.subr.bf16.mxu0 0
    %2184 = vmatpush1.bf16.msra.mxu0 0
    %2185 = vmatprep.subr.bf16.mxu0 0
    %2186 = vmatpush1.bf16.msra.mxu0 0
    %2187 = vmatprep.subr.bf16.mxu0 0
    %2188 = vmatpush1.bf16.msra.mxu0 0
    %2189 = vmatprep.subr.bf16.mxu0 0
    %2190 = vmatpush1.bf16.msra.mxu0 0
    %2191 = vmatprep.subr.bf16.mxu0 0
    %2192 = vmatpush1.bf16.msra.mxu0 0
    %2193 = vmatprep.subr.bf16.mxu0 0
    %2194 = vmatpush1.bf16.msra.mxu0 0
    %2195 = vmatprep.subr.bf16.mxu0 0
    %2196 = vmatpush1.bf16.msra.mxu0 0
    %2197 = vmatprep.subr.bf16.mxu0 0
    %2198 = vmatpush1.bf16.msra.mxu0 0
    %2199 = vmatprep.subr.bf16.mxu0 0
    %2200 = vmatpush1.bf16.msra.mxu0 0
    %2201 = vmatprep.subr.bf16.mxu0 0
    %2202 = vmatpush1.bf16.msra.mxu0 0
    %2203 = vmatprep.subr.bf16.mxu0 0
    %2204 = vmatpush1.bf16.msra.mxu0 0
    %2205 = vmatprep.subr.bf16.mxu0 0
    %2206 = vmatpush1.bf16.msra.mxu0 0
    %2207 = vmatprep.subr.bf16.mxu0 0
    %2208 = vmatpush1.bf16.msra.mxu0 0
    %2209 = vmatprep.subr.bf16.mxu0 0
    %2210 = vmatpush1.bf16.msra.mxu0 0
    %2211 = vmatprep.subr.bf16.mxu0 0
    %2212 = vmatpush1.bf16.msra.mxu0 0
    %2213 = vmatprep.mubr.bf16.mxu0 0
    %2214 = vmatmul.mubr.bf16.gmra.mrb[0].mxu0 %v2179
    %v2215 = vpop.f32.mrb[0].mxu0
    %v2216 = vadd.f32 0.0, %v2215
    %v2217 = vpop.f32.mrb[0].mxu0
    %v2218 = vpop.f32.mrb[0].mxu0
    %v2219 = vpop.f32.mrb[0].mxu0
    %2220 = vdwg.mxu0
    %v2221 = vsel %vm63, %v2087, 0.0
    %v2222 = vsel %vm63, %v2130, 0.0
    %v2223 = vadd.f32 %v2221, %v2222
    %v2224 = vsel %vm63, %v2173, 0.0
    %v2225 = vadd.f32 %v2223, %v2224
    %v2226 = vsel %vm63, %v2216, 0.0
    %v2227 = vadd.f32 %v2225, %v2226
    %v2228 = vlaneseq
    %v2229 = vshrl.u32 %v2228, 7
    %v2230 = vsub.s32 0, %v2229
    %v2231 = vrot.slane %v36, %v2230
    %v2232 = vadd.f32 %v1174, %v2231
    %v2233 = vadd.f32 %v2227, %v2231
    %v2234 = vadd.f32 %v2232, %v31
    %v2235 = vadd.f32 %v2233, %v32
    %v2236 = vsel %vm63, %v2234, 0.0
    %2237 = vadd.xlane.f32.xlu0 %v2236
    %v2238 = vpop.xlane.xlu0 %2237
    %v2239 = vsel %vm63, %v2235, 0.0
    %2240 = vadd.xlane.f32.xlu0 %v2239
    %v2241 = vpop.xlane.xlu0 %2240
    %v2242 = vrcp.pop 32.0
    %v2243 = vmul.f32 %v2238, %v2242
    %v2244 = vmul.f32 %v2241, %v2242
    %v2245 = vsub.f32 %v2234, %v2243
    %v2246 = vsub.f32 %v2235, %v2244
    %v2247 = vmul.f32 %v2245, %v2245
    %v2248 = vmul.f32 %v2246, %v2246
    %v2249 = vsel %vm63, %v2247, 0.0
    %2250 = vadd.xlane.f32.xlu0 %v2249
    %v2251 = vpop.xlane.xlu0 %2250
    %v2252 = vsel %vm63, %v2248, 0.0
    %2253 = vadd.xlane.f32.xlu0 %v2252
    %v2254 = vpop.xlane.xlu0 %2253
    %v2255 = vmul.f32 %v2251, %v2242
    %v2256 = vmul.f32 %v2254, %v2242
    %v2257 = vadd.f32 %v2255, 1e-05
    %v2258 = vadd.f32 %v2256, 1e-05
    %v2259 = vrsqrt.pop %v2257
    %v2260 = vrsqrt.pop %v2258
    %v2261 = vmul.f32 %v2245, %v2259
    %v2262 = vmul.f32 %v2246, %v2260
    %v2263 = vlaneseq
    %v2264 = vshrl.u32 %v2263, 7
    %v2265 = vsub.s32 1, %v2264
    %v2266 = vrot.slane %v36, %v2265
    %v2267 = vmul.f32 %v2261, %v2266
    %v2268 = vmul.f32 %v2262, %v2266
    %v2269 = vlaneseq
    %v2270 = vshrl.u32 %v2269, 7
    %v2271 = vsub.s32 2, %v2270
    %v2272 = vrot.slane %v36, %v2271
    %v2273 = vadd.f32 %v2267, %v2272
    %v2274 = vadd.f32 %v2268, %v2272
    %v2275 = vpack.c.bf16 %v2274, %v2273
    %v2276 = vld [vmem:[%s4] sm:$0xf]
    %v2277 = vld [vmem:[%s4 + $0x4] sm:$0xf]
    %v2278 = vld [vmem:[%s4 + $0x8] sm:$0xf]
    %v2279 = vld [vmem:[%s4 + $0xc] sm:$0xf]
    %v2281 = vlaneseq
    %v2282 = vshrl.u32 %v2281, 7
    %v2283 = vsub.s32 0, %v2282
    %v2284 = vrot.slane %v35, %v2283
    %v2290 = vunpack.c.l.b16 %v2276
    %v2291 = vunpack.c.l.b16 %v2277
    %v2292 = vunpack.c.l.b16 %v2278
    %v2293 = vunpack.c.l.b16 %v2279
    %v2294 = vpack.c.b16 %v2291, %v2290
    %v2295 = vpack.c.b16 %v2293, %v2292
    %v2299 = vsel %vm63, %v2275, 0
    %2301 = vmatprep.subr.bf16.mxu0 0
    %2302 = vmatpush1.bf16.msra.mxu0 %v2294
    %2303 = vmatprep.subr.bf16.mxu0 0
    %2304 = vmatpush1.bf16.msra.mxu0 %v2295
    %2305 = vmatprep.subr.bf16.mxu0 0
    %2306 = vmatpush1.bf16.msra.mxu0 0
    %2307 = vmatprep.subr.bf16.mxu0 0
    %2308 = vmatpush1.bf16.msra.mxu0 0
    %2309 = vmatprep.subr.bf16.mxu0 0
    %2310 = vmatpush1.bf16.msra.mxu0 0
    %2311 = vmatprep.subr.bf16.mxu0 0
    %2312 = vmatpush1.bf16.msra.mxu0 0
    %2313 = vmatprep.subr.bf16.mxu0 0
    %2314 = vmatpush1.bf16.msra.mxu0 0
    %2315 = vmatprep.subr.bf16.mxu0 0
    %2316 = vmatpush1.bf16.msra.mxu0 0
    %2317 = vmatprep.subr.bf16.mxu0 0
    %2318 = vmatpush1.bf16.msra.mxu0 0
    %2319 = vmatprep.subr.bf16.mxu0 0
    %2320 = vmatpush1.bf16.msra.mxu0 0
    %2321 = vmatprep.subr.bf16.mxu0 0
    %2322 = vmatpush1.bf16.msra.mxu0 0
    %2323 = vmatprep.subr.bf16.mxu0 0
    %2324 = vmatpush1.bf16.msra.mxu0 0
    %2325 = vmatprep.subr.bf16.mxu0 0
    %2326 = vmatpush1.bf16.msra.mxu0 0
    %2327 = vmatprep.subr.bf16.mxu0 0
    %2328 = vmatpush1.bf16.msra.mxu0 0
    %2329 = vmatprep.subr.bf16.mxu0 0
    %2330 = vmatpush1.bf16.msra.mxu0 0
    %2331 = vmatprep.subr.bf16.mxu0 0
    %2332 = vmatpush1.bf16.msra.mxu0 0
    %2333 = vmatprep.mubr.bf16.mxu0 0
    %2334 = vmatmul.mubr.bf16.gmra.mrb[0].mxu0 %v2299
    %v2335 = vpop.f32.mrb[0].mxu0
    %v2336 = vadd.f32 %v2284, %v2335
    %v2337 = vpop.f32.mrb[0].mxu0
    %v2338 = vpop.f32.mrb[0].mxu0
    %v2339 = vadd.f32 %v2284, %v2338
    %v2340 = vpop.f32.mrb[0].mxu0
    %2341 = vdwg.mxu0
    %v2342 = vmax.f32 %v2336, 0.0
    %v2343 = vmax.f32 %v2339, 0.0
    %v2344 = vpack.c.bf16 %v2343, %v2342
    %v2345 = vld [vmem:[%s6] sm:$0xf]
    %v2346 = vld [vmem:[%s6 + $0x4] sm:$0xf]
    %v2347 = vld [vmem:[%s6 + $0x8] sm:$0xf]
    %v2348 = vld [vmem:[%s6 + $0xc] sm:$0xf]
    %v2349 = vld [vmem:[%s6 + $0x10] sm:$0xf]
    %v2350 = vld [vmem:[%s6 + $0x14] sm:$0xf]
    %v2351 = vld [vmem:[%s6 + $0x18] sm:$0xf]
    %v2352 = vld [vmem:[%s6 + $0x1c] sm:$0xf]
    %v2353 = vld [vmem:[%s6 + $0x20] sm:$0xf]
    %v2354 = vld [vmem:[%s6 + $0x24] sm:$0xf]
    %v2355 = vld [vmem:[%s6 + $0x28] sm:$0xf]
    %v2356 = vld [vmem:[%s6 + $0x2c] sm:$0xf]
    %v2357 = vld [vmem:[%s6 + $0x30] sm:$0xf]
    %v2358 = vld [vmem:[%s6 + $0x34] sm:$0xf]
    %v2359 = vld [vmem:[%s6 + $0x38] sm:$0xf]
    %v2360 = vld [vmem:[%s6 + $0x3c] sm:$0xf]
    %v2361 = vlaneseq
    %v2362 = vshrl.u32 %v2361, 7
    %v2363 = vsub.s32 3, %v2362
    %v2364 = vrot.slane %v36, %v2363
    %v2381 = vunpack.c.l.b16 %v2345
    %v2382 = vunpack.c.l.b16 %v2346
    %v2383 = vunpack.c.l.b16 %v2347
    %v2384 = vunpack.c.l.b16 %v2348
    %v2385 = vunpack.c.l.b16 %v2349
    %v2386 = vunpack.c.l.b16 %v2350
    %v2387 = vunpack.c.l.b16 %v2351
    %v2388 = vunpack.c.l.b16 %v2352
    %v2389 = vunpack.c.l.b16 %v2353
    %v2390 = vunpack.c.l.b16 %v2354
    %v2391 = vunpack.c.l.b16 %v2355
    %v2392 = vunpack.c.l.b16 %v2356
    %v2393 = vunpack.c.l.b16 %v2357
    %v2394 = vunpack.c.l.b16 %v2358
    %v2395 = vunpack.c.l.b16 %v2359
    %v2396 = vunpack.c.l.b16 %v2360
    %v2397 = vpack.c.b16 %v2382, %v2381
    %v2398 = vpack.c.b16 %v2384, %v2383
    %v2399 = vpack.c.b16 %v2386, %v2385
    %v2400 = vpack.c.b16 %v2388, %v2387
    %v2401 = vpack.c.b16 %v2390, %v2389
    %v2402 = vpack.c.b16 %v2392, %v2391
    %v2403 = vpack.c.b16 %v2394, %v2393
    %v2404 = vpack.c.b16 %v2396, %v2395
    %2413 = vmatprep.subr.bf16.mxu0 0
    %2414 = vmatpush1.bf16.msra.mxu0 %v2397
    %2415 = vmatprep.subr.bf16.mxu0 0
    %2416 = vmatpush1.bf16.msra.mxu0 %v2398
    %2417 = vmatprep.subr.bf16.mxu0 0
    %2418 = vmatpush1.bf16.msra.mxu0 %v2399
    %2419 = vmatprep.subr.bf16.mxu0 0
    %2420 = vmatpush1.bf16.msra.mxu0 %v2400
    %2421 = vmatprep.subr.bf16.mxu0 0
    %2422 = vmatpush1.bf16.msra.mxu0 %v2401
    %2423 = vmatprep.subr.bf16.mxu0 0
    %2424 = vmatpush1.bf16.msra.mxu0 %v2402
    %2425 = vmatprep.subr.bf16.mxu0 0
    %2426 = vmatpush1.bf16.msra.mxu0 %v2403
    %2427 = vmatprep.subr.bf16.mxu0 0
    %2428 = vmatpush1.bf16.msra.mxu0 %v2404
    %2429 = vmatprep.subr.bf16.mxu0 0
    %2430 = vmatpush1.bf16.msra.mxu0 0
    %2431 = vmatprep.subr.bf16.mxu0 0
    %2432 = vmatpush1.bf16.msra.mxu0 0
    %2433 = vmatprep.subr.bf16.mxu0 0
    %2434 = vmatpush1.bf16.msra.mxu0 0
    %2435 = vmatprep.subr.bf16.mxu0 0
    %2436 = vmatpush1.bf16.msra.mxu0 0
    %2437 = vmatprep.subr.bf16.mxu0 0
    %2438 = vmatpush1.bf16.msra.mxu0 0
    %2439 = vmatprep.subr.bf16.mxu0 0
    %2440 = vmatpush1.bf16.msra.mxu0 0
    %2441 = vmatprep.subr.bf16.mxu0 0
    %2442 = vmatpush1.bf16.msra.mxu0 0
    %2443 = vmatprep.subr.bf16.mxu0 0
    %2444 = vmatpush1.bf16.msra.mxu0 0
    %2445 = vmatprep.mubr.bf16.mxu0 0
    %2446 = vmatmul.mubr.bf16.gmra.mrb[0].mxu0 %v2344
    %v2447 = vpop.f32.mrb[0].mxu0
    %v2448 = vadd.f32 %v2364, %v2447
    %v2449 = vpop.f32.mrb[0].mxu0
    %v2450 = vpop.f32.mrb[0].mxu0
    %v2451 = vadd.f32 %v2364, %v2450
    %v2452 = vpop.f32.mrb[0].mxu0
    %2453 = vdwg.mxu0
    %v2454 = vadd.f32 %v2448, %v2273
    %v2455 = vadd.f32 %v2451, %v2274
    %v2456 = vsel %vm63, %v2454, 0.0
    %2457 = vadd.xlane.f32.xlu0 %v2456
    %v2458 = vpop.xlane.xlu0 %2457
    %v2459 = vsel %vm63, %v2455, 0.0
    %2460 = vadd.xlane.f32.xlu0 %v2459
    %v2461 = vpop.xlane.xlu0 %2460
    %v2462 = vmul.f32 %v2458, %v2242
    %v2463 = vmul.f32 %v2461, %v2242
    %v2464 = vsub.f32 %v2454, %v2462
    %v2465 = vsub.f32 %v2455, %v2463
    %v2466 = vmul.f32 %v2464, %v2464
    %v2467 = vmul.f32 %v2465, %v2465
    %v2468 = vsel %vm63, %v2466, 0.0
    %2469 = vadd.xlane.f32.xlu0 %v2468
    %v2470 = vpop.xlane.xlu0 %2469
    %v2471 = vsel %vm63, %v2467, 0.0
    %2472 = vadd.xlane.f32.xlu0 %v2471
    %v2473 = vpop.xlane.xlu0 %2472
    %v2474 = vmul.f32 %v2470, %v2242
    %v2475 = vmul.f32 %v2473, %v2242
    %v2476 = vadd.f32 %v2474, 1e-05
    %v2477 = vadd.f32 %v2475, 1e-05
    %v2478 = vrsqrt.pop %v2476
    %v2479 = vrsqrt.pop %v2477
    %v2480 = vmul.f32 %v2464, %v2478
    %v2481 = vmul.f32 %v2465, %v2479
    %v2482 = vlaneseq
    %v2483 = vshrl.u32 %v2482, 7
    %v2484 = vsub.s32 4, %v2483
    %v2485 = vrot.slane %v36, %v2484
    %v2486 = vmul.f32 %v2480, %v2485
    %v2487 = vmul.f32 %v2481, %v2485
    %v2488 = vlaneseq
    %v2489 = vshrl.u32 %v2488, 7
    %v2490 = vsub.s32 5, %v2489
    %v2491 = vrot.slane %v36, %v2490
    %v2492 = vadd.f32 %v2486, %v2491
    %v2493 = vadd.f32 %v2487, %v2491
    %2494 = vst.msk [vmem:[#allocation2] sm:$0xff] %vm63, %v2492
    %2495 = vst.msk [vmem:[#allocation2 + $0x8] sm:$0xff] %vm63, %v2493
    // Predicated region
    $region34: #{tpu_custom_call.1} parent=1 // pred_check
      _
    $region35: #{tpu_custom_call.1} parent=1 // pred_check_branch
      %2497 = sbr.rel (0) target = $region37
    $region36: #{tpu_custom_call.1} parent=1 // pred_region
      %s2499 = ssub.s32 256, 256
      %2500 = vsyncadd [#allocation3], %s2499
      %s2501 = sshll.u32 [#allocation2], 4
      %s2502 = int_to_ptr.vmem [resolvable:$true] %s2501
      %2507 = dma.vmem_to_hbm [thread:$0]  %s2502, 256, %s8, [#allocation3], 128, 128, 8
    $region37: #{tpu_custom_call.1} parent=1 // pred_fallthru
      _
    // Predicated region
    $region38: #{tpu_custom_call.1} parent=1 // pred_check
      _
    $region39: #{tpu_custom_call.1} parent=1 // pred_check_branch
      %2509 = sbr.rel (0) target = $region41
    $region40: #{tpu_custom_call.1} parent=1 // pred_region
      %2510 = dma.done [#allocation3], 256
    $region41: #{tpu_custom_call.1} parent=1 // pred_fallthru
      _
    %2511 = vsyncpa [#allocation3], 1

</llo_original>
